<compile_context>
chip_gen: v6e
topology: v6e:2x2x1
jax: 0.10.0
libtpu: 0.0.40
codegen_flags: <defaults>
</compile_context>

<pallas_src>
import functools
import math

import jax
import jax.numpy as jnp
from jax.experimental import pallas as pl
from jax.experimental.pallas import tpu as pltpu

_MIB = 1024 * 1024


def _largest_divisor_tile(total, want, mult):
    """Largest divisor of `total` that is <= `want` and a multiple of `mult`.

    Falls back to `total` (the full extent is always layout-legal), so callers
    never hit a remainder tile / divisibility assert.
    """
    want = max(1, min(want, total))
    if want == total:
        return total
    for t in range(want, 0, -1):
        if total % t == 0 and t % mult == 0:
            return t
    return total


def _clamp_vmem(need_bytes):
    # Request what the kernel actually needs plus ~40% headroom for compiler
    # temporaries; never below the 32 MiB default scoped limit and never close
    # to v7x's 64 MiB physical per-core VMEM.
    return int(min(max(need_bytes * 1.4, 32 * _MIB), 48 * _MIB))


# -----------------------------------------------------------------------------
# Kernel 1: fused [backbone stand-in Conv1d(k=1) + ReLU] + [input_proj Conv1d(k=1)]
#           + [transformer Q/K/V projections] on a position-major (BN*L, C) view.
# One row-tiled MXU pipeline; emits src, q (pre-scaled), k, v in (rows, D)
# layout so the attention kernel needs no transposes and no re-projection.
# -----------------------------------------------------------------------------
def _fused_src_qkv_kernel(x_ref, w1_ref, b1_ref, w2_ref, b2_ref, wqkv_ref,
                          src_ref, q_ref, k_ref, v_ref, *, d_model, scale):
    # x: (TR, C) bf16; w1: (C, H) bf16; w2: (H, D) bf16; wqkv: (D, 3D) bf16.
    x = x_ref[...]
    h = jnp.dot(x, w1_ref[...], preferred_element_type=jnp.float32)      # (TR, H)
    h = jnp.maximum(h + b1_ref[...], 0.0)                                # bias+ReLU
    s = jnp.dot(h.astype(jnp.bfloat16), w2_ref[...],
                preferred_element_type=jnp.float32)                      # (TR, D)
    s = s + b2_ref[...]
    src_bf = s.astype(jnp.bfloat16)
    src_ref[...] = src_bf

    # Single (rows, D) @ (D, 3D) MXU op for Q, K and V together.
    qkv = jnp.dot(src_bf, wqkv_ref[...], preferred_element_type=jnp.float32)
    D = d_model
    q_ref[...] = (qkv[:, :D] * scale).astype(jnp.bfloat16)   # scale folded here (f32)
    k_ref[...] = qkv[:, D:2 * D].astype(jnp.bfloat16)
    v_ref[...] = qkv[:, 2 * D:].astype(jnp.bfloat16)


def _conv_vmem_bytes(tile_rows, C, H, D):
    in_b = tile_rows * C * 2
    w_b = (C * H + H * D + 3 * D * D) * 2 + (H + D) * 4
    out_b = 4 * tile_rows * D * 2
    tmp_b = tile_rows * (H + 4 * D) * 4                       # h, s, qkv temporaries
    return 2 * (in_b + w_b + out_b) + tmp_b                   # double-buffered I/O


def fused_src_qkv(x_rc, w1, b1, w2, b2, wqkv, *, scale, tile_rows=2048):
    """x_rc: (R, C) bf16 position-major rows.  Returns (src, q, k, v), each (R, D) bf16."""
    R, C = x_rc.shape
    H = w1.shape[1]
    D = w2.shape[1]

    # Big tiles (per-step overhead ~0.35 us), multiple of 16 (bf16 sublanes),
    # but keep >= 2 grid steps when possible so both v7x TensorCores get work.
    tile_rows = _largest_divisor_tile(R, min(tile_rows, max(R // 2, 16)), 16)
    assert R % tile_rows == 0

    b1r = b1.reshape(1, H).astype(jnp.float32)
    b2r = b2.reshape(1, D).astype(jnp.float32)

    out_sds = jax.ShapeDtypeStruct((R, D), jnp.bfloat16)
    row_spec = pl.BlockSpec((tile_rows, D), lambda i: (i, 0))

    def full(shape):
        return pl.BlockSpec(shape, lambda i: (0, 0))

    # NOTE: on v7x with large d_model, the grid-invariant weight specs could be
    # single-buffered (pipeline_mode=pl.Buffered(1)) to halve their VMEM cost.
    return pl.pallas_call(
        functools.partial(_fused_src_qkv_kernel, d_model=D, scale=scale),
        out_shape=(out_sds, out_sds, out_sds, out_sds),
        grid_spec=pltpu.PrefetchScalarGridSpec(
            num_scalar_prefetch=0,
            grid=(R // tile_rows,),
            in_specs=[
                pl.BlockSpec((tile_rows, C), lambda i: (i, 0)),
                full((C, H)), full((1, H)),
                full((H, D)), full((1, D)),
                full((D, 3 * D)),
            ],
            out_specs=[row_spec, row_spec, row_spec, row_spec],
        ),
        compiler_params=pltpu.CompilerParams(
            dimension_semantics=("parallel",),
            vmem_limit_bytes=_clamp_vmem(_conv_vmem_bytes(tile_rows, C, H, D))),
    )(x_rc, w1, b1r, w2, b2r, wqkv)


# -----------------------------------------------------------------------------
# Kernel 2: transformer stand-in — flash-style single-head self-attention
# (+ output projection + residual).  Consumes precomputed q (scaled), k, v, src
# so NO projections are redone inside the kv loop.
# Grid = (batch blocks, Q blocks, KV blocks); online softmax state in VMEM scratch.
# -----------------------------------------------------------------------------
def _flash_attn_kernel(q_ref, k_ref, v_ref, src_ref, wo_ref, o_ref,
                       m_sc, l_sc, acc_sc):
    bt, tq, d = q_ref.shape
    kv = pl.program_id(2)

    @pl.when(kv == 0)
    def _init():
        m_sc[...] = jnp.full(m_sc.shape, -jnp.inf, dtype=m_sc.dtype)
        l_sc[...] = jnp.zeros(l_sc.shape, dtype=l_sc.dtype)
        acc_sc[...] = jnp.zeros(acc_sc.shape, dtype=acc_sc.dtype)

    # Online-softmax update (bf16 MXU operands, f32 accumulation / state).
    s = jnp.einsum("bqd,bkd->bqk", q_ref[...], k_ref[...],
                   preferred_element_type=jnp.float32)                   # (bt,tq,tk)
    m_new = jnp.maximum(m_sc[...], s.max(axis=-1, keepdims=True))
    alpha = jnp.exp(m_sc[...] - m_new)
    p = jnp.exp(s - m_new)   # f32 exp (safe on v5e; bf16 exp is a v6e/v7x-only option)
    l_sc[...] = alpha * l_sc[...] + p.sum(axis=-1, keepdims=True)
    acc_sc[...] = alpha * acc_sc[...] + jnp.einsum(
        "bqk,bkd->bqd", p.astype(jnp.bfloat16), v_ref[...],
        preferred_element_type=jnp.float32)
    m_sc[...] = m_new

    @pl.when(kv == pl.num_programs(2) - 1)
    def _finalize():
        attn = acc_sc[...] * pl.reciprocal(l_sc[...], approx=True)       # (bt,tq,d)
        a2 = attn.astype(jnp.bfloat16).reshape(bt * tq, d)
        out = jnp.dot(a2, wo_ref[...], preferred_element_type=jnp.float32)
        # Residual against the bf16 src activation (documented mixed-precision choice).
        out = out + src_ref[...].astype(jnp.float32).reshape(bt * tq, d)
        o_ref[...] = out.reshape(bt, tq, d).astype(o_ref.dtype)


def _attn_vmem_bytes(bb, tq, tk, d):
    io_b = (2 * bb * tq * d + 2 * bb * tk * d) * 2      # q,src and k,v blocks (bf16)
    w_b = d * d * 2
    out_b = bb * tq * d * 2
    scr_b = bb * tq * (d + 2) * 4
    tmp_b = 2 * bb * tq * tk * 4 + bb * tq * d * 4      # s, p, pv temporaries
    return 2 * (io_b + w_b + out_b) + scr_b + tmp_b     # double-buffered I/O


def flash_self_attention(q, k, v, src, wo, *, block_q=256, block_kv=256,
                         batch_block=1, out_dtype=jnp.bfloat16):
    """q/k/v/src: (BN, L, D) bf16 -> (BN, L, D); flash attention + Wo + residual."""
    bn, L, d = q.shape
    # 256-wide blocks fill the 256x256 MXU on v6e/v7x; picker guarantees
    # divisibility and bf16-friendly (x16) sublane counts (or full extent).
    block_q = _largest_divisor_tile(L, block_q, 16)
    block_kv = _largest_divisor_tile(L, block_kv, 16)
    batch_block = max(1, min(batch_block, bn))
    while bn % batch_block:
        batch_block -= 1

    grid = (bn // batch_block, L // block_q, L // block_kv)

    q_spec = pl.BlockSpec((batch_block, block_q, d), lambda bi, qi, ki: (bi, qi, 0))
    kv_spec = pl.BlockSpec((batch_block, block_kv, d), lambda bi, qi, ki: (bi, ki, 0))
    w_spec = pl.BlockSpec((d, d), lambda bi, qi, ki: (0, 0))

    need = _attn_vmem_bytes(batch_block, block_q, block_kv, d)
    return pl.pallas_call(
        _flash_attn_kernel,
        out_shape=jax.ShapeDtypeStruct((bn, L, d), out_dtype),
        grid_spec=pltpu.PrefetchScalarGridSpec(
            num_scalar_prefetch=0,
            grid=grid,
            in_specs=[q_spec, kv_spec, kv_spec, q_spec, w_spec],
            out_specs=q_spec,
            scratch_shapes=[
                pltpu.VMEM((batch_block, block_q, 1), jnp.float32),    # running max
                pltpu.VMEM((batch_block, block_q, 1), jnp.float32),    # running sum
                pltpu.VMEM((batch_block, block_q, d), jnp.float32),    # accumulator
            ]),
        compiler_params=pltpu.CompilerParams(
            dimension_semantics=("parallel", "parallel", "arbitrary"),
            vmem_limit_bytes=_clamp_vmem(need)),
    )(q, k, v, src, wo)


# -----------------------------------------------------------------------------
# Tranmodel forward
# -----------------------------------------------------------------------------
def tranmodel_forward(x, params, *, block_q=256, block_kv=256, batch_block=2,
                      conv_tile_rows=2048, out_dtype=jnp.bfloat16):
    b, n, c, l = x.shape
    bn = b * n
    d_model = params["proj_w"].shape[1]
    scale = 1.0 / math.sqrt(d_model)

    # rearrange 'b n c l -> (b n) c l', then a one-time position-major layout
    # swap of the SMALL C-channel raw input, done in bf16 so the swap and the
    # kernel-1 read move half the bytes (the MXU consumes bf16 anyway).  The
    # large (bn, L, d_model) activations never get an XLA transpose.
    x_pm = jnp.transpose(x.reshape(bn, c, l).astype(jnp.bfloat16),
                         (0, 2, 1)).reshape(bn * l, c)

    # TODO(synk): `backbone` is an injected nn.Module; stand-in = pointwise
    # Conv1d(c -> num_channels) + ReLU.
    # TODO(synk): `transformer` is an injected nn.Module; stand-in = one
    # single-head flash-style self-attention layer + output proj + residual.
    # Kernel 1 fuses backbone-conv + input_proj-conv + Q/K/V projections
    # (wq|wk|wv concatenated into one (D, 3D) weight) so the attention kernel
    # never re-projects K/V per Q-block.
    wqkv = jnp.concatenate([params["wq"], params["wk"], params["wv"]], axis=1)
    src, q, k, v = fused_src_qkv(
        x_pm, params["bb_w"], params["bb_b"], params["proj_w"], params["proj_b"],
        wqkv, scale=scale, tile_rows=conv_tile_rows)      # each (bn*l, d_model) bf16

    shp = (bn, l, d_model)                                 # free reshapes, no transpose
    out = flash_self_attention(
        q.reshape(shp), k.reshape(shp), v.reshape(shp), src.reshape(shp),
        params["wo"], block_q=block_q, block_kv=block_kv,
        batch_block=batch_block, out_dtype=out_dtype)
    return out                                             # (bn, l, d_model)


def init_params(key, c_in, num_channels, d_model):
    ks = jax.random.split(key, 8)
    s = 0.1

    def w(k, shape):
        return (s * jax.random.normal(k, shape, jnp.float32)).astype(jnp.bfloat16)

    return {
        # Conv weights stored pre-transposed as (in, out) so every in-kernel
        # matmul is a plain (rows, in) @ (in, out) MXU op (equivalent to
        # transposing the PyTorch (out, in, 1) conv weight once at init).
        "bb_w":   w(ks[0], (c_in, num_channels)),
        "bb_b":   s * jax.random.normal(ks[1], (num_channels,), jnp.float32),
        "proj_w": w(ks[2], (num_channels, d_model)),
        "proj_b": s * jax.random.normal(ks[3], (d_model,), jnp.float32),
        "wq":     w(ks[4], (d_model, d_model)),
        "wk":     w(ks[5], (d_model, d_model)),
        "wv":     w(ks[6], (d_model, d_model)),
        "wo":     w(ks[7], (d_model, d_model)),
    }


def reference_forward(x, params):
    """Pure-JAX f32 reference with the same (bf16-rounded) weights."""
    b, n, c, l = x.shape
    bn = b * n
    xr = jnp.transpose(x.reshape(bn, c, l), (0, 2, 1)).astype(jnp.float32)
    w1 = params["bb_w"].astype(jnp.float32)
    w2 = params["proj_w"].astype(jnp.float32)
    h = jnp.maximum(xr @ w1 + params["bb_b"], 0.0)
    src = h @ w2 + params["proj_b"]                                    # (bn, l, d)
    wq = params["wq"].astype(jnp.float32)
    wk = params["wk"].astype(jnp.float32)
    wv = params["wv"].astype(jnp.float32)
    wo = params["wo"].astype(jnp.float32)
    d = src.shape[-1]
    q = (src @ wq) * (1.0 / math.sqrt(d))
    k = src @ wk
    v = src @ wv
    scores = q @ jnp.swapaxes(k, 1, 2)
    p = jax.nn.softmax(scores, axis=-1)
    return p @ v @ wo + src


if __name__ == "__main__":
    B, N, C, L = 2, 2, 4, 16          # input 'b n c l'
    NUM_CHANNELS = 8                  # backbone.num_channels
    D_MODEL = 128                     # transformer.d_model (multiple of 128 -> lane-dense)

    key = jax.random.PRNGKey(0)
    k_x, k_p = jax.random.split(key)
    x = jax.random.normal(k_x, (B, N, C, L), jnp.float32)
    params = init_params(k_p, C, NUM_CHANNELS, D_MODEL)

    fwd = jax.jit(functools.partial(
        tranmodel_forward, block_q=256, block_kv=256, batch_block=2,
        conv_tile_rows=2048))
    out = fwd(x, params)
    jax.block_until_ready(out)
    assert out.shape == (B * N, L, D_MODEL), out.shape

    ref = reference_forward(x, params)
    err = float(jnp.max(jnp.abs(out.astype(jnp.float32) - ref)))
    assert err < 5e-2, f"max abs error vs reference = {err}"
    print("KERNEL_OK")
</pallas_src>

<mosaic_0001>
module attributes {stable_mosaic.version = 11 : i64} {
  func.func @_fused_src_qkv_kernel(%arg0: i32, %arg1: memref<32x4xbf16, #tpu.memory_space<vmem>>, %arg2: memref<4x8xbf16, #tpu.memory_space<vmem>>, %arg3: memref<1x8xf32, #tpu.memory_space<vmem>>, %arg4: memref<8x128xbf16, #tpu.memory_space<vmem>>, %arg5: memref<1x128xf32, #tpu.memory_space<vmem>>, %arg6: memref<128x384xbf16, #tpu.memory_space<vmem>>, %arg7: memref<32x128xbf16, #tpu.memory_space<vmem>>, %arg8: memref<32x128xbf16, #tpu.memory_space<vmem>>, %arg9: memref<32x128xbf16, #tpu.memory_space<vmem>>, %arg10: memref<32x128xbf16, #tpu.memory_space<vmem>>) attributes {dimension_semantics = [#tpu.dimension_semantics<parallel>], iteration_bounds = array<i64: 2>, scalar_prefetch = 0 : i64, scratch_operands = 0 : i64, tpu.core_type = #tpu.core_type<tc>, window_params = [{transform_indices = @transform_0, window_bounds = array<i64: 32, 4>}, {pipeline_mode = #tpu.pipeline_mode<synchronous>, transform_indices = @transform_1, window_bounds = array<i64: 4, 8>}, {pipeline_mode = #tpu.pipeline_mode<synchronous>, transform_indices = @transform_2, window_bounds = array<i64: 1, 8>}, {pipeline_mode = #tpu.pipeline_mode<synchronous>, transform_indices = @transform_3, window_bounds = array<i64: 8, 128>}, {pipeline_mode = #tpu.pipeline_mode<synchronous>, transform_indices = @transform_4, window_bounds = array<i64: 1, 128>}, {pipeline_mode = #tpu.pipeline_mode<synchronous>, transform_indices = @transform_5, window_bounds = array<i64: 128, 384>}, {transform_indices = @transform_6, window_bounds = array<i64: 32, 128>}, {transform_indices = @transform_7, window_bounds = array<i64: 32, 128>}, {transform_indices = @transform_8, window_bounds = array<i64: 32, 128>}, {transform_indices = @transform_9, window_bounds = array<i64: 32, 128>}]} {
    %c0 = arith.constant 0 : index
    %c0_0 = arith.constant 0 : index
    %0 = vector.load %arg1[%c0, %c0_0] : memref<32x4xbf16, #tpu.memory_space<vmem>>, vector<32x4xbf16>
    %c0_1 = arith.constant 0 : index
    %c0_2 = arith.constant 0 : index
    %1 = vector.load %arg2[%c0_1, %c0_2] : memref<4x8xbf16, #tpu.memory_space<vmem>>, vector<4x8xbf16>
    %cst = arith.constant dense<0.000000e+00> : vector<32x8xf32>
    %2 = tpu.matmul %0, %1, %cst {dimension_numbers = #tpu.dot_dimension_numbers<[1], [0], [0], [1], [0, 0, 1, 1], [], []>} : vector<32x4xbf16>, vector<4x8xbf16>, vector<32x8xf32> -> vector<32x8xf32>
    %c0_3 = arith.constant 0 : index
    %c0_4 = arith.constant 0 : index
    %3 = vector.load %arg3[%c0_3, %c0_4] : memref<1x8xf32, #tpu.memory_space<vmem>>, vector<1x8xf32>
    %4 = vector.broadcast %3 : vector<1x8xf32> to vector<32x8xf32>
    %5 = arith.addf %2, %4 : vector<32x8xf32>
    %cst_5 = arith.constant 0.000000e+00 : f32
    %6 = vector.broadcast %cst_5 : f32 to vector<32x8xf32>
    %7 = arith.maximumf %5, %6 : vector<32x8xf32>
    %8 = arith.truncf %7 : vector<32x8xf32> to vector<32x8xbf16>
    %c0_6 = arith.constant 0 : index
    %c0_7 = arith.constant 0 : index
    %9 = vector.load %arg4[%c0_6, %c0_7] : memref<8x128xbf16, #tpu.memory_space<vmem>>, vector<8x128xbf16>
    %cst_8 = arith.constant dense<0.000000e+00> : vector<32x128xf32>
    %10 = tpu.matmul %8, %9, %cst_8 {dimension_numbers = #tpu.dot_dimension_numbers<[1], [0], [0], [1], [0, 0, 1, 1], [], []>} : vector<32x8xbf16>, vector<8x128xbf16>, vector<32x128xf32> -> vector<32x128xf32>
    %c0_9 = arith.constant 0 : index
    %c0_10 = arith.constant 0 : index
    %11 = vector.load %arg5[%c0_9, %c0_10] : memref<1x128xf32, #tpu.memory_space<vmem>>, vector<1x128xf32>
    %12 = vector.broadcast %11 : vector<1x128xf32> to vector<32x128xf32>
    %13 = arith.addf %10, %12 : vector<32x128xf32>
    %14 = arith.truncf %13 : vector<32x128xf32> to vector<32x128xbf16>
    %c0_11 = arith.constant 0 : index
    %c0_12 = arith.constant 0 : index
    %15 = vector.load %arg7[%c0_11, %c0_12] : memref<32x128xbf16, #tpu.memory_space<vmem>>, vector<32x128xbf16>
    tpu.vector_store %arg7[%c0_11, %c0_12], %14 {strides = array<i32>} : memref<32x128xbf16, #tpu.memory_space<vmem>>, vector<32x128xbf16>,
    %c0_13 = arith.constant 0 : index
    %c0_14 = arith.constant 0 : index
    %16 = vector.load %arg6[%c0_13, %c0_14] : memref<128x384xbf16, #tpu.memory_space<vmem>>, vector<128x384xbf16>
    %cst_15 = arith.constant dense<0.000000e+00> : vector<32x384xf32>
    %17 = tpu.matmul %14, %16, %cst_15 {dimension_numbers = #tpu.dot_dimension_numbers<[1], [0], [0], [1], [0, 0, 1, 1], [], []>} : vector<32x128xbf16>, vector<128x384xbf16>, vector<32x384xf32> -> vector<32x384xf32>
    %18 = vector.extract_strided_slice %17 {offsets = [0, 0], sizes = [32, 128], strides = [1, 1]} : vector<32x384xf32> to vector<32x128xf32>
    %cst_16 = arith.constant 0.0883883461 : f32
    %19 = vector.broadcast %cst_16 : f32 to vector<32x128xf32>
    %20 = arith.mulf %18, %19 : vector<32x128xf32>
    %21 = arith.truncf %20 : vector<32x128xf32> to vector<32x128xbf16>
    %c0_17 = arith.constant 0 : index
    %c0_18 = arith.constant 0 : index
    %22 = vector.load %arg8[%c0_17, %c0_18] : memref<32x128xbf16, #tpu.memory_space<vmem>>, vector<32x128xbf16>
    tpu.vector_store %arg8[%c0_17, %c0_18], %21 {strides = array<i32>} : memref<32x128xbf16, #tpu.memory_space<vmem>>, vector<32x128xbf16>,
    %23 = vector.extract_strided_slice %17 {offsets = [0, 128], sizes = [32, 128], strides = [1, 1]} : vector<32x384xf32> to vector<32x128xf32>
    %24 = arith.truncf %23 : vector<32x128xf32> to vector<32x128xbf16>
    %c0_19 = arith.constant 0 : index
    %c0_20 = arith.constant 0 : index
    %25 = vector.load %arg9[%c0_19, %c0_20] : memref<32x128xbf16, #tpu.memory_space<vmem>>, vector<32x128xbf16>
    tpu.vector_store %arg9[%c0_19, %c0_20], %24 {strides = array<i32>} : memref<32x128xbf16, #tpu.memory_space<vmem>>, vector<32x128xbf16>,
    %26 = vector.extract_strided_slice %17 {offsets = [0, 256], sizes = [32, 128], strides = [1, 1]} : vector<32x384xf32> to vector<32x128xf32>
    %27 = arith.truncf %26 : vector<32x128xf32> to vector<32x128xbf16>
    %c0_21 = arith.constant 0 : index
    %c0_22 = arith.constant 0 : index
    %28 = vector.load %arg10[%c0_21, %c0_22] : memref<32x128xbf16, #tpu.memory_space<vmem>>, vector<32x128xbf16>
    tpu.vector_store %arg10[%c0_21, %c0_22], %27 {strides = array<i32>} : memref<32x128xbf16, #tpu.memory_space<vmem>>, vector<32x128xbf16>,
    return
  }
  func.func @transform_0(%arg0: i32) -> (i32, i32) {
    %c0_i32 = arith.constant 0 : i32
    %c0_i32_0 = arith.constant 0 : i32
    return %arg0, %c0_i32 : i32, i32
  }
  func.func @transform_1(%arg0: i32) -> (i32, i32) {
    %c0_i32 = arith.constant 0 : i32
    %c0_i32_0 = arith.constant 0 : i32
    %c0_i32_1 = arith.constant 0 : i32
    return %c0_i32, %c0_i32_0 : i32, i32
  }
  func.func @transform_2(%arg0: i32) -> (i32, i32) {
    %c0_i32 = arith.constant 0 : i32
    %c0_i32_0 = arith.constant 0 : i32
    %c0_i32_1 = arith.constant 0 : i32
    return %c0_i32, %c0_i32_0 : i32, i32
  }
  func.func @transform_3(%arg0: i32) -> (i32, i32) {
    %c0_i32 = arith.constant 0 : i32
    %c0_i32_0 = arith.constant 0 : i32
    %c0_i32_1 = arith.constant 0 : i32
    return %c0_i32, %c0_i32_0 : i32, i32
  }
  func.func @transform_4(%arg0: i32) -> (i32, i32) {
    %c0_i32 = arith.constant 0 : i32
    %c0_i32_0 = arith.constant 0 : i32
    %c0_i32_1 = arith.constant 0 : i32
    return %c0_i32, %c0_i32_0 : i32, i32
  }
  func.func @transform_5(%arg0: i32) -> (i32, i32) {
    %c0_i32 = arith.constant 0 : i32
    %c0_i32_0 = arith.constant 0 : i32
    %c0_i32_1 = arith.constant 0 : i32
    return %c0_i32, %c0_i32_0 : i32, i32
  }
  func.func @transform_6(%arg0: i32) -> (i32, i32) {
    %c0_i32 = arith.constant 0 : i32
    %c0_i32_0 = arith.constant 0 : i32
    return %arg0, %c0_i32 : i32, i32
  }
  func.func @transform_7(%arg0: i32) -> (i32, i32) {
    %c0_i32 = arith.constant 0 : i32
    %c0_i32_0 = arith.constant 0 : i32
    return %arg0, %c0_i32 : i32, i32
  }
  func.func @transform_8(%arg0: i32) -> (i32, i32) {
    %c0_i32 = arith.constant 0 : i32
    %c0_i32_0 = arith.constant 0 : i32
    return %arg0, %c0_i32 : i32, i32
  }
  func.func @transform_9(%arg0: i32) -> (i32, i32) {
    %c0_i32 = arith.constant 0 : i32
    %c0_i32_0 = arith.constant 0 : i32
    return %arg0, %c0_i32 : i32, i32
  }
}

module attributes {stable_mosaic.version = 11 : i64} {
  func.func @_flash_attn_kernel(%arg0: i32, %arg1: i32, %arg2: i32, %arg3: memref<2x16x128xbf16, #tpu.memory_space<vmem>>, %arg4: memref<2x16x128xbf16, #tpu.memory_space<vmem>>, %arg5: memref<2x16x128xbf16, #tpu.memory_space<vmem>>, %arg6: memref<2x16x128xbf16, #tpu.memory_space<vmem>>, %arg7: memref<128x128xbf16, #tpu.memory_space<vmem>>, %arg8: memref<2x16x128xbf16, #tpu.memory_space<vmem>>, %arg9: memref<2x16x1xf32, #tpu.memory_space<vmem>>, %arg10: memref<2x16x1xf32, #tpu.memory_space<vmem>>, %arg11: memref<2x16x128xf32, #tpu.memory_space<vmem>>) attributes {dimension_semantics = [#tpu.dimension_semantics<parallel>, #tpu.dimension_semantics<parallel>, #tpu.dimension_semantics<arbitrary>], iteration_bounds = array<i64: 2, 1, 1>, scalar_prefetch = 0 : i64, scratch_operands = 3 : i64, tpu.core_type = #tpu.core_type<tc>, window_params = [{transform_indices = @transform_0, window_bounds = array<i64: 2, 16, 128>}, {transform_indices = @transform_1, window_bounds = array<i64: 2, 16, 128>}, {transform_indices = @transform_2, window_bounds = array<i64: 2, 16, 128>}, {transform_indices = @transform_3, window_bounds = array<i64: 2, 16, 128>}, {pipeline_mode = #tpu.pipeline_mode<synchronous>, transform_indices = @transform_4, window_bounds = array<i64: 128, 128>}, {transform_indices = @transform_5, window_bounds = array<i64: 2, 16, 128>}]} {
    %c0_i32 = arith.constant 0 : i32
    %0 = arith.cmpi eq, %arg2, %c0_i32 : i32
    %1 = arith.extui %0 : i1 to i32
    %c0_i32_0 = arith.constant 0 : i32
    %2 = arith.cmpi ne, %1, %c0_i32_0 : i32
    scf.if %2 {
      %cst_35 = arith.constant 0xFF800000 : f32
      %34 = vector.broadcast %cst_35 : f32 to vector<2x16x1xf32>
      %c0_36 = arith.constant 0 : index
      %c0_37 = arith.constant 0 : index
      %c0_38 = arith.constant 0 : index
      %35 = vector.load %arg9[%c0_36, %c0_37, %c0_38] : memref<2x16x1xf32, #tpu.memory_space<vmem>>, vector<2x16x1xf32>
      tpu.vector_store %arg9[%c0_36, %c0_37, %c0_38], %34 {strides = array<i32>} : memref<2x16x1xf32, #tpu.memory_space<vmem>>, vector<2x16x1xf32>,
      %cst_39 = arith.constant 0.000000e+00 : f32
      %36 = vector.broadcast %cst_39 : f32 to vector<2x16x1xf32>
      %c0_40 = arith.constant 0 : index
      %c0_41 = arith.constant 0 : index
      %c0_42 = arith.constant 0 : index
      %37 = vector.load %arg10[%c0_40, %c0_41, %c0_42] : memref<2x16x1xf32, #tpu.memory_space<vmem>>, vector<2x16x1xf32>
      tpu.vector_store %arg10[%c0_40, %c0_41, %c0_42], %36 {strides = array<i32>} : memref<2x16x1xf32, #tpu.memory_space<vmem>>, vector<2x16x1xf32>,
      %cst_43 = arith.constant 0.000000e+00 : f32
      %38 = vector.broadcast %cst_43 : f32 to vector<2x16x128xf32>
      %c0_44 = arith.constant 0 : index
      %c0_45 = arith.constant 0 : index
      %c0_46 = arith.constant 0 : index
      %39 = vector.load %arg11[%c0_44, %c0_45, %c0_46] : memref<2x16x128xf32, #tpu.memory_space<vmem>>, vector<2x16x128xf32>
      tpu.vector_store %arg11[%c0_44, %c0_45, %c0_46], %38 {strides = array<i32>} : memref<2x16x128xf32, #tpu.memory_space<vmem>>, vector<2x16x128xf32>,
    } else {
    }
    %c0 = arith.constant 0 : index
    %c0_1 = arith.constant 0 : index
    %c0_2 = arith.constant 0 : index
    %3 = vector.load %arg3[%c0, %c0_1, %c0_2] : memref<2x16x128xbf16, #tpu.memory_space<vmem>>, vector<2x16x128xbf16>
    %c0_3 = arith.constant 0 : index
    %c0_4 = arith.constant 0 : index
    %c0_5 = arith.constant 0 : index
    %4 = vector.load %arg4[%c0_3, %c0_4, %c0_5] : memref<2x16x128xbf16, #tpu.memory_space<vmem>>, vector<2x16x128xbf16>
    "tpu.trace_start"() <{level = 10 : i32, message = "bqd,bkd->bqk"}> : () -> ()
    %cst = arith.constant dense<0.000000e+00> : vector<2x16x16xf32>
    %5 = tpu.matmul %3, %4, %cst {dimension_numbers = #tpu.dot_dimension_numbers<[2], [2], [1], [1], [0, 0, 0, 1, 1, 1], [0], [0]>} : vector<2x16x128xbf16>, vector<2x16x128xbf16>, vector<2x16x16xf32> -> vector<2x16x16xf32>
    "tpu.trace_stop"() : () -> ()
    %c0_6 = arith.constant 0 : index
    %c0_7 = arith.constant 0 : index
    %c0_8 = arith.constant 0 : index
    %6 = vector.load %arg9[%c0_6, %c0_7, %c0_8] : memref<2x16x1xf32, #tpu.memory_space<vmem>>, vector<2x16x1xf32>
    %cst_9 = arith.constant dense<0xFF800000> : vector<2x16xf32>
    %7 = vector.multi_reduction <maximumf>, %5, %cst_9 [2] : vector<2x16x16xf32> to vector<2x16xf32>
    %8 = vector.shape_cast %7 : vector<2x16xf32> to vector<2x16x1xf32>
    %9 = arith.maximumf %6, %8 : vector<2x16x1xf32>
    %c0_10 = arith.constant 0 : index
    %c0_11 = arith.constant 0 : index
    %c0_12 = arith.constant 0 : index
    %10 = vector.load %arg9[%c0_10, %c0_11, %c0_12] : memref<2x16x1xf32, #tpu.memory_space<vmem>>, vector<2x16x1xf32>
    %11 = arith.subf %10, %9 : vector<2x16x1xf32>
    %12 = math.exp %11 : vector<2x16x1xf32>
    %13 = vector.broadcast %9 : vector<2x16x1xf32> to vector<2x16x16xf32>
    %14 = arith.subf %5, %13 : vector<2x16x16xf32>
    %15 = math.exp %14 : vector<2x16x16xf32>
    %c0_13 = arith.constant 0 : index
    %c0_14 = arith.constant 0 : index
    %c0_15 = arith.constant 0 : index
    %16 = vector.load %arg10[%c0_13, %c0_14, %c0_15] : memref<2x16x1xf32, #tpu.memory_space<vmem>>, vector<2x16x1xf32>
    %17 = arith.mulf %12, %16 : vector<2x16x1xf32>
    %cst_16 = arith.constant dense<0.000000e+00> : vector<2x16xf32>
    %18 = vector.multi_reduction <add>, %15, %cst_16 [2] : vector<2x16x16xf32> to vector<2x16xf32>
    %19 = vector.shape_cast %18 : vector<2x16xf32> to vector<2x16x1xf32>
    %20 = arith.addf %17, %19 : vector<2x16x1xf32>
    %c0_17 = arith.constant 0 : index
    %c0_18 = arith.constant 0 : index
    %c0_19 = arith.constant 0 : index
    %21 = vector.load %arg10[%c0_17, %c0_18, %c0_19] : memref<2x16x1xf32, #tpu.memory_space<vmem>>, vector<2x16x1xf32>
    tpu.vector_store %arg10[%c0_17, %c0_18, %c0_19], %20 {strides = array<i32>} : memref<2x16x1xf32, #tpu.memory_space<vmem>>, vector<2x16x1xf32>,
    %c0_20 = arith.constant 0 : index
    %c0_21 = arith.constant 0 : index
    %c0_22 = arith.constant 0 : index
    %22 = vector.load %arg11[%c0_20, %c0_21, %c0_22] : memref<2x16x128xf32, #tpu.memory_space<vmem>>, vector<2x16x128xf32>
    %23 = vector.broadcast %12 : vector<2x16x1xf32> to vector<2x16x128xf32>
    %24 = arith.mulf %23, %22 : vector<2x16x128xf32>
    %25 = arith.truncf %15 : vector<2x16x16xf32> to vector<2x16x16xbf16>
    %c0_23 = arith.constant 0 : index
    %c0_24 = arith.constant 0 : index
    %c0_25 = arith.constant 0 : index
    %26 = vector.load %arg5[%c0_23, %c0_24, %c0_25] : memref<2x16x128xbf16, #tpu.memory_space<vmem>>, vector<2x16x128xbf16>
    "tpu.trace_start"() <{level = 10 : i32, message = "bqk,bkd->bqd"}> : () -> ()
    %cst_26 = arith.constant dense<0.000000e+00> : vector<2x16x128xf32>
    %27 = tpu.matmul %25, %26, %cst_26 {dimension_numbers = #tpu.dot_dimension_numbers<[2], [1], [1], [2], [0, 0, 0, 1, 1, 2], [0], [0]>} : vector<2x16x16xbf16>, vector<2x16x128xbf16>, vector<2x16x128xf32> -> vector<2x16x128xf32>
    "tpu.trace_stop"() : () -> ()
    %28 = arith.addf %24, %27 : vector<2x16x128xf32>
    %c0_27 = arith.constant 0 : index
    %c0_28 = arith.constant 0 : index
    %c0_29 = arith.constant 0 : index
    %29 = vector.load %arg11[%c0_27, %c0_28, %c0_29] : memref<2x16x128xf32, #tpu.memory_space<vmem>>, vector<2x16x128xf32>
    tpu.vector_store %arg11[%c0_27, %c0_28, %c0_29], %28 {strides = array<i32>} : memref<2x16x128xf32, #tpu.memory_space<vmem>>, vector<2x16x128xf32>,
    %c0_30 = arith.constant 0 : index
    %c0_31 = arith.constant 0 : index
    %c0_32 = arith.constant 0 : index
    %30 = vector.load %arg9[%c0_30, %c0_31, %c0_32] : memref<2x16x1xf32, #tpu.memory_space<vmem>>, vector<2x16x1xf32>
    tpu.vector_store %arg9[%c0_30, %c0_31, %c0_32], %9 {strides = array<i32>} : memref<2x16x1xf32, #tpu.memory_space<vmem>>, vector<2x16x1xf32>,
    %c0_i32_33 = arith.constant 0 : i32
    %31 = arith.cmpi eq, %arg2, %c0_i32_33 : i32
    %32 = arith.extui %31 : i1 to i32
    %c0_i32_34 = arith.constant 0 : i32
    %33 = arith.cmpi ne, %32, %c0_i32_34 : i32
    scf.if %33 {
      %c0_35 = arith.constant 0 : index
      %c0_36 = arith.constant 0 : index
      %c0_37 = arith.constant 0 : index
      %34 = vector.load %arg11[%c0_35, %c0_36, %c0_37] : memref<2x16x128xf32, #tpu.memory_space<vmem>>, vector<2x16x128xf32>
      %c0_38 = arith.constant 0 : index
      %c0_39 = arith.constant 0 : index
      %c0_40 = arith.constant 0 : index
      %35 = vector.load %arg10[%c0_38, %c0_39, %c0_40] : memref<2x16x1xf32, #tpu.memory_space<vmem>>, vector<2x16x1xf32>
      %36 = tpu.reciprocal %35 {approx = true} : vector<2x16x1xf32> -> vector<2x16x1xf32>
      %37 = vector.broadcast %36 : vector<2x16x1xf32> to vector<2x16x128xf32>
      %38 = arith.mulf %34, %37 : vector<2x16x128xf32>
      %39 = arith.truncf %38 : vector<2x16x128xf32> to vector<2x16x128xbf16>
      %40 = vector.shape_cast %39 : vector<2x16x128xbf16> to vector<32x128xbf16>
      %c0_41 = arith.constant 0 : index
      %c0_42 = arith.constant 0 : index
      %41 = vector.load %arg7[%c0_41, %c0_42] : memref<128x128xbf16, #tpu.memory_space<vmem>>, vector<128x128xbf16>
      %cst_43 = arith.constant dense<0.000000e+00> : vector<32x128xf32>
      %42 = tpu.matmul %40, %41, %cst_43 {dimension_numbers = #tpu.dot_dimension_numbers<[1], [0], [0], [1], [0, 0, 1, 1], [], []>} : vector<32x128xbf16>, vector<128x128xbf16>, vector<32x128xf32> -> vector<32x128xf32>
      %c0_44 = arith.constant 0 : index
      %c0_45 = arith.constant 0 : index
      %c0_46 = arith.constant 0 : index
      %43 = vector.load %arg6[%c0_44, %c0_45, %c0_46] : memref<2x16x128xbf16, #tpu.memory_space<vmem>>, vector<2x16x128xbf16>
      %44 = arith.extf %43 : vector<2x16x128xbf16> to vector<2x16x128xf32>
      %45 = vector.shape_cast %44 : vector<2x16x128xf32> to vector<32x128xf32>
      %46 = arith.addf %42, %45 : vector<32x128xf32>
      %47 = vector.shape_cast %46 : vector<32x128xf32> to vector<2x16x128xf32>
      %48 = arith.truncf %47 : vector<2x16x128xf32> to vector<2x16x128xbf16>
      %c0_47 = arith.constant 0 : index
      %c0_48 = arith.constant 0 : index
      %c0_49 = arith.constant 0 : index
      %49 = vector.load %arg8[%c0_47, %c0_48, %c0_49] : memref<2x16x128xbf16, #tpu.memory_space<vmem>>, vector<2x16x128xbf16>
      tpu.vector_store %arg8[%c0_47, %c0_48, %c0_49], %48 {strides = array<i32>} : memref<2x16x128xbf16, #tpu.memory_space<vmem>>, vector<2x16x128xbf16>,
    } else {
    }
    return
  }
  func.func @transform_0(%arg0: i32, %arg1: i32, %arg2: i32) -> (i32, i32, i32) {
    %c0_i32 = arith.constant 0 : i32
    %c0_i32_0 = arith.constant 0 : i32
    return %arg0, %arg1, %c0_i32 : i32, i32, i32
  }
  func.func @transform_1(%arg0: i32, %arg1: i32, %arg2: i32) -> (i32, i32, i32) {
    %c0_i32 = arith.constant 0 : i32
    %c0_i32_0 = arith.constant 0 : i32
    return %arg0, %arg2, %c0_i32 : i32, i32, i32
  }
  func.func @transform_2(%arg0: i32, %arg1: i32, %arg2: i32) -> (i32, i32, i32) {
    %c0_i32 = arith.constant 0 : i32
    %c0_i32_0 = arith.constant 0 : i32
    return %arg0, %arg2, %c0_i32 : i32, i32, i32
  }
  func.func @transform_3(%arg0: i32, %arg1: i32, %arg2: i32) -> (i32, i32, i32) {
    %c0_i32 = arith.constant 0 : i32
    %c0_i32_0 = arith.constant 0 : i32
    return %arg0, %arg1, %c0_i32 : i32, i32, i32
  }
  func.func @transform_4(%arg0: i32, %arg1: i32, %arg2: i32) -> (i32, i32) {
    %c0_i32 = arith.constant 0 : i32
    %c0_i32_0 = arith.constant 0 : i32
    %c0_i32_1 = arith.constant 0 : i32
    return %c0_i32, %c0_i32_0 : i32, i32
  }
  func.func @transform_5(%arg0: i32, %arg1: i32, %arg2: i32) -> (i32, i32, i32) {
    %c0_i32 = arith.constant 0 : i32
    %c0_i32_0 = arith.constant 0 : i32
    return %arg0, %arg1, %c0_i32 : i32, i32, i32
  }
}

</mosaic_0001>

<llo_original>
// kernel: tranmodel_forward.3
$region0: #{tranmodel_forward.3}
  #allocation0 [shape = 'u32[]', space=smem, size = 0x4, offset = 0x4, fixed_abs, tag = 'smem constant byte address 0x4 - core index']
  #allocation1 [shape = 'u32[144,128]{1,0:T(1,128)}', space=vmem, size = 0x12000, scoped, tag = 'internal scratch']
  #allocation2 [shape = 'f32[2,16,1]{2,1,0:T(8,128)}', space=vmem, size = 0x4000, scoped, tag = 'scratch operand']
  #allocation3 [shape = 'f32[2,16,1]{2,1,0:T(8,128)}', space=vmem, size = 0x4000, scoped, tag = 'scratch operand']
  #allocation4 [shape = 'f32[2,16,128]{2,1,0:T(8,128)}', space=vmem, size = 0x4000, scoped, tag = 'scratch operand']
  %s0 = inlined_call_operand.vmem [shape: bf16[4,16,128], index: 0, kind: input, shape index: {}]
  %s1 = inlined_call_operand.vmem [shape: bf16[4,16,128], index: 1, kind: input, shape index: {}]
  %s2 = inlined_call_operand.vmem [shape: bf16[4,16,128], index: 2, kind: input, shape index: {}]
  %s3 = inlined_call_operand.vmem [shape: bf16[4,16,128], index: 3, kind: input, shape index: {}]
  %s4 = inlined_call_operand.vmem [shape: bf16[128,128], index: 4, kind: input, shape index: {}]
  %s5 = inlined_call_operand.hbm [shape: bf16[4,16,128], index: 5, kind: output, shape index: {}]
  %s6 = sld [smem:[#allocation0]]
  $region61: #{tranmodel_forward.3} parent=0
    _
  %s8 = ssub.s32 1, %s6
  %s9 = scalar_select 0, %s8, %s6
  $region1: #{tranmodel_forward.3} parent=0
    #allocation5 [shape = 'u8[16384]{0}', space=vmem, size = 0x4000, scoped, tag = 'output window, operand 0']
    #allocation6 [shape = 's32[2]{0}', space=sflag, size = 0x8, scoped, tag = 'scoped memory for tranmodel_forward.3']
    %10 = vsyncpa [#allocation6], 0
    %s11 = scalar_lea.sflag [#allocation6], 1
    %12 = vsyncpa %s11, 0
    loop: start=0, step=1, limit=4
    $region2: #{tranmodel_forward.3} parent=1 // loop_pre_header
      _
    $region3: #{tranmodel_forward.3} parent=1 // loop_header
      %s14 = sphi 0, %s18
      %p15 = scmp.ge.s32.totalorder %s14, 4
      %s21 = sphi 0, %s40
      %s22 = sphi 0, %s36
      %s23 = sphi 0, %s32
      %s24 = sphi 0, %s21
      %s25 = sphi 0, %s22
      %s26 = sphi 0, %s23
      %s27 = sphi 0, %s24
      %s28 = sphi 0, %s25
      %s29 = sphi 0, %s26
      %s45 = sphi 0, %s47
      %s48 = sphi 0, %s45
      %s49 = sphi 0, %s48
      %s65 = sphi 0, %s49
      %s73 = sphi 0, %s75
      %s76 = sphi 0, %s73
      %s77 = sphi 0, %s76
      %s93 = sphi 0, %s77
      %s101 = sphi 0, %s103
      %s104 = sphi 0, %s101
      %s105 = sphi 0, %s104
      %s121 = sphi 0, %s105
      %s129 = sphi 0, %s131
      %s132 = sphi 0, %s129
      %s133 = sphi 0, %s132
      %s149 = sphi 0, %s133
      %s153 = sphi 0, %s153
      %s155 = sphi 0, %s153
      %s156 = sphi 0, %s155
      %s170 = sphi 0, %s156
      %s178 = sphi 0, %s180
      %s181 = sphi 0, %s178
      %s182 = sphi 0, %s181
      %s198 = sphi 0, %s182
    $region4: #{tranmodel_forward.3} parent=1 // loop_header_branch
      %17 = sbr.rel (%p15) target = $region8
    $region5: #{tranmodel_forward.3} parent=1 // loop_body
      %s19 = ssub.s32 %s14, 1
      %s20 = ssub.s32 %s14, 2
      %s30 = sadd.s32 1, %s23
      %p31 = scmp.ge.s32.totalorder %s30, 1
      %s32 = scalar_select %p31, 0, %s30
      %s33 = sadd.s32 1, %s22
      %s34 = scalar_select %p31, %s33, %s22
      %p35 = scmp.ge.s32.totalorder %s34, 1
      %s36 = scalar_select %p35, 0, %s34
      %s37 = sadd.s32 1, %s21
      %s38 = scalar_select %p35, %s37, %s21
      %p39 = scmp.ge.s32.totalorder %s38, 2
      %s40 = scalar_select %p39, 0, %s38
      %s41 = ssub.s32 %s21, %s40
      %s42 = ssub.s32 %s22, %s36
      %s43 = sor.u32 %s41, %s42
      %p44 = scmp.eq.s32.totalorder %s43, 0
      %s46 = sadd.s32 %s45, 1
      %s47 = scalar_select %p44, %s45, %s46
      %p50 = pneg %p44
      %p51 = scmp.eq.s32.totalorder %s14, 1
      %p52 = por %p50, %p51
      %p53 = scmp.ne.s32.totalorder %s45, %s48
      %p54 = scmp.eq.s32.totalorder %s14, 0
      %p55 = por %p53, %p54
      %p56 = scmp.ne.s32.totalorder %s45, %s48
      %p57 = scmp.eq.s32.totalorder %s19, 1
      %p58 = por %p56, %p57
      %p59 = scmp.ne.s32.totalorder %s48, %s49
      %p60 = scmp.eq.s32.totalorder %s19, 0
      %p61 = por %p59, %p60
      %p62 = scmp.ne.s32.totalorder %s48, %s49
      %p63 = scmp.eq.s32.totalorder %s20, 1
      %p64 = por %p62, %p63
      %p66 = scmp.ne.s32.totalorder %s49, %s65
      %p67 = scmp.eq.s32.totalorder %s20, 0
      %p68 = por %p66, %p67
      %s69 = ssub.s32 %s21, %s40
      %s70 = ssub.s32 %s23, %s32
      %s71 = sor.u32 %s69, %s70
      %p72 = scmp.eq.s32.totalorder %s71, 0
      %s74 = sadd.s32 %s73, 1
      %s75 = scalar_select %p72, %s73, %s74
      %p78 = pneg %p72
      %p79 = scmp.eq.s32.totalorder %s14, 1
      %p80 = por %p78, %p79
      %p81 = scmp.ne.s32.totalorder %s73, %s76
      %p82 = scmp.eq.s32.totalorder %s14, 0
      %p83 = por %p81, %p82
      %p84 = scmp.ne.s32.totalorder %s73, %s76
      %p85 = scmp.eq.s32.totalorder %s19, 1
      %p86 = por %p84, %p85
      %p87 = scmp.ne.s32.totalorder %s76, %s77
      %p88 = scmp.eq.s32.totalorder %s19, 0
      %p89 = por %p87, %p88
      %p90 = scmp.ne.s32.totalorder %s76, %s77
      %p91 = scmp.eq.s32.totalorder %s20, 1
      %p92 = por %p90, %p91
      %p94 = scmp.ne.s32.totalorder %s77, %s93
      %p95 = scmp.eq.s32.totalorder %s20, 0
      %p96 = por %p94, %p95
      %s97 = ssub.s32 %s21, %s40
      %s98 = ssub.s32 %s23, %s32
      %s99 = sor.u32 %s97, %s98
      %p100 = scmp.eq.s32.totalorder %s99, 0
      %s102 = sadd.s32 %s101, 1
      %s103 = scalar_select %p100, %s101, %s102
      %p106 = pneg %p100
      %p107 = scmp.eq.s32.totalorder %s14, 1
      %p108 = por %p106, %p107
      %p109 = scmp.ne.s32.totalorder %s101, %s104
      %p110 = scmp.eq.s32.totalorder %s14, 0
      %p111 = por %p109, %p110
      %p112 = scmp.ne.s32.totalorder %s101, %s104
      %p113 = scmp.eq.s32.totalorder %s19, 1
      %p114 = por %p112, %p113
      %p115 = scmp.ne.s32.totalorder %s104, %s105
      %p116 = scmp.eq.s32.totalorder %s19, 0
      %p117 = por %p115, %p116
      %p118 = scmp.ne.s32.totalorder %s104, %s105
      %p119 = scmp.eq.s32.totalorder %s20, 1
      %p120 = por %p118, %p119
      %p122 = scmp.ne.s32.totalorder %s105, %s121
      %p123 = scmp.eq.s32.totalorder %s20, 0
      %p124 = por %p122, %p123
      %s125 = ssub.s32 %s21, %s40
      %s126 = ssub.s32 %s22, %s36
      %s127 = sor.u32 %s125, %s126
      %p128 = scmp.eq.s32.totalorder %s127, 0
      %s130 = sadd.s32 %s129, 1
      %s131 = scalar_select %p128, %s129, %s130
      %p134 = pneg %p128
      %p135 = scmp.eq.s32.totalorder %s14, 1
      %p136 = por %p134, %p135
      %p137 = scmp.ne.s32.totalorder %s129, %s132
      %p138 = scmp.eq.s32.totalorder %s14, 0
      %p139 = por %p137, %p138
      %p140 = scmp.ne.s32.totalorder %s129, %s132
      %p141 = scmp.eq.s32.totalorder %s19, 1
      %p142 = por %p140, %p141
      %p143 = scmp.ne.s32.totalorder %s132, %s133
      %p144 = scmp.eq.s32.totalorder %s19, 0
      %p145 = por %p143, %p144
      %p146 = scmp.ne.s32.totalorder %s132, %s133
      %p147 = scmp.eq.s32.totalorder %s20, 1
      %p148 = por %p146, %p147
      %p150 = scmp.ne.s32.totalorder %s133, %s149
      %p151 = scmp.eq.s32.totalorder %s20, 0
      %p152 = por %p150, %p151
      %s154 = sadd.s32 %s153, 1
      %p157 = scmp.eq.s32.totalorder %s14, 1
      %p158 = scmp.ne.s32.totalorder %s153, %s155
      %p159 = scmp.eq.s32.totalorder %s14, 0
      %p160 = por %p158, %p159
      %p161 = scmp.ne.s32.totalorder %s153, %s155
      %p162 = scmp.eq.s32.totalorder %s19, 1
      %p163 = por %p161, %p162
      %p164 = scmp.ne.s32.totalorder %s155, %s156
      %p165 = scmp.eq.s32.totalorder %s19, 0
      %p166 = por %p164, %p165
      %p167 = scmp.ne.s32.totalorder %s155, %s156
      %p168 = scmp.eq.s32.totalorder %s20, 1
      %p169 = por %p167, %p168
      %p171 = scmp.ne.s32.totalorder %s156, %s170
      %p172 = scmp.eq.s32.totalorder %s20, 0
      %p173 = por %p171, %p172
      %s174 = ssub.s32 %s21, %s40
      %s175 = ssub.s32 %s22, %s36
      %s176 = sor.u32 %s174, %s175
      %p177 = scmp.eq.s32.totalorder %s176, 0
      %s179 = sadd.s32 %s178, 1
      %s180 = scalar_select %p177, %s178, %s179
      %p183 = pneg %p177
      %p184 = scmp.eq.s32.totalorder %s14, 1
      %p185 = por %p183, %p184
      %p186 = scmp.ne.s32.totalorder %s178, %s181
      %p187 = scmp.eq.s32.totalorder %s14, 0
      %p188 = por %p186, %p187
      %p189 = scmp.ne.s32.totalorder %s178, %s181
      %p190 = scmp.eq.s32.totalorder %s19, 1
      %p191 = por %p189, %p190
      %p192 = scmp.ne.s32.totalorder %s181, %s182
      %p193 = scmp.eq.s32.totalorder %s19, 0
      %p194 = por %p192, %p193
      %p195 = scmp.ne.s32.totalorder %s181, %s182
      %p196 = scmp.eq.s32.totalorder %s20, 1
      %p197 = por %p195, %p196
      %p199 = scmp.ne.s32.totalorder %s182, %s198
      %p200 = scmp.eq.s32.totalorder %s20, 0
      %p201 = por %p199, %p200
      %p202 = scmp.le.s32.totalorder 1, %s14
      %p203 = scmp.lt.s32.totalorder %s14, 3
      %p204 = pnand %p202, %p203
      %p205 = pneg %p204
      // Predicated region
      $region9: #{tranmodel_forward.3} parent=5 // pred_check
        _
      $region10: #{tranmodel_forward.3} parent=5 // pred_check_branch
        %207 = sbr.rel (%p204) target = $region12
      $region11: #{tranmodel_forward.3} parent=5 // pred_region
        %s208 = ssub.s32 %s14, 1
        // Predicated region
        $region13: #{tranmodel_forward.3} parent=11 // pred_check
          %p209 = pneg %p166
        $region14: #{tranmodel_forward.3} parent=11 // pred_check_branch
          %211 = sbr.rel (%p209) target = $region16
        $region15: #{tranmodel_forward.3} parent=11 // pred_region
          _
        $region16: #{tranmodel_forward.3} parent=11 // pred_fallthru
          _
      $region12: #{tranmodel_forward.3} parent=5 // pred_fallthru
        _
      %p212 = scmp.lt.s32.totalorder %s14, 2
      // Predicated region
      $region17: #{tranmodel_forward.3} parent=5 // pred_check
        %p213 = pneg %p212
      $region18: #{tranmodel_forward.3} parent=5 // pred_check_branch
        %215 = sbr.rel (%p213) target = $region20
      $region19: #{tranmodel_forward.3} parent=5 // pred_region
        // Predicated region
        $region21: #{tranmodel_forward.3} parent=19 // pred_check
          %p216 = pneg %p55
        $region22: #{tranmodel_forward.3} parent=19 // pred_check_branch
          %218 = sbr.rel (%p216) target = $region24
        $region23: #{tranmodel_forward.3} parent=19 // pred_region
          %s219 = smul.u32 2, %s21
          %s220 = smul.u32 2, %s22
          %p221 = scmp.lt.s32.totalorder %s219, 3
          %s222 = scalar_select %p221, %s219, 3
          %p223 = scmp.lt.s32.totalorder %s220, 1
          %s224 = scalar_select %p223, %s220, 1
          %s225 = smul.addr %s222, 2
          %s226 = sadd.s32 %s224, %s225
          %s227 = smul.addr %s226, 4
          %s228 = scalar_lea.vmem %s0, %s227
          %s229 = smul.u32 2, %s21
          %s230 = smul.u32 2, %s22
        $region24: #{tranmodel_forward.3} parent=19 // pred_fallthru
          _
        // Predicated region
        $region25: #{tranmodel_forward.3} parent=19 // pred_check
          %p231 = pneg %p83
        $region26: #{tranmodel_forward.3} parent=19 // pred_check_branch
          %233 = sbr.rel (%p231) target = $region28
        $region27: #{tranmodel_forward.3} parent=19 // pred_region
          %s234 = smul.u32 2, %s21
          %s235 = smul.u32 2, %s23
          %p236 = scmp.lt.s32.totalorder %s234, 3
          %s237 = scalar_select %p236, %s234, 3
          %p238 = scmp.lt.s32.totalorder %s235, 1
          %s239 = scalar_select %p238, %s235, 1
          %s240 = smul.addr %s237, 2
          %s241 = sadd.s32 %s239, %s240
          %s242 = smul.addr %s241, 4
          %s243 = scalar_lea.vmem %s1, %s242
          %s244 = smul.u32 2, %s21
          %s245 = smul.u32 2, %s23
        $region28: #{tranmodel_forward.3} parent=19 // pred_fallthru
          _
        // Predicated region
        $region29: #{tranmodel_forward.3} parent=19 // pred_check
          %p246 = pneg %p111
        $region30: #{tranmodel_forward.3} parent=19 // pred_check_branch
          %248 = sbr.rel (%p246) target = $region32
        $region31: #{tranmodel_forward.3} parent=19 // pred_region
          %s249 = smul.u32 2, %s21
          %s250 = smul.u32 2, %s23
          %p251 = scmp.lt.s32.totalorder %s249, 3
          %s252 = scalar_select %p251, %s249, 3
          %p253 = scmp.lt.s32.totalorder %s250, 1
          %s254 = scalar_select %p253, %s250, 1
          %s255 = smul.addr %s252, 2
          %s256 = sadd.s32 %s254, %s255
          %s257 = smul.addr %s256, 4
          %s258 = scalar_lea.vmem %s2, %s257
          %s259 = smul.u32 2, %s21
          %s260 = smul.u32 2, %s23
        $region32: #{tranmodel_forward.3} parent=19 // pred_fallthru
          _
        // Predicated region
        $region33: #{tranmodel_forward.3} parent=19 // pred_check
          %p261 = pneg %p139
        $region34: #{tranmodel_forward.3} parent=19 // pred_check_branch
          %263 = sbr.rel (%p261) target = $region36
        $region35: #{tranmodel_forward.3} parent=19 // pred_region
          %s264 = smul.u32 2, %s21
          %s265 = smul.u32 2, %s22
          %p266 = scmp.lt.s32.totalorder %s264, 3
          %s267 = scalar_select %p266, %s264, 3
          %p268 = scmp.lt.s32.totalorder %s265, 1
          %s269 = scalar_select %p268, %s265, 1
          %s270 = smul.addr %s267, 2
          %s271 = sadd.s32 %s269, %s270
          %s272 = smul.addr %s271, 4
          %s273 = scalar_lea.vmem %s3, %s272
          %s274 = smul.u32 2, %s21
          %s275 = smul.u32 2, %s22
        $region36: #{tranmodel_forward.3} parent=19 // pred_fallthru
          _
      $region20: #{tranmodel_forward.3} parent=5 // pred_fallthru
        _
      %p276 = scmp.le.s32.totalorder 1, %s14
      %p277 = scmp.lt.s32.totalorder %s14, 3
      %p278 = pnand %p276, %p277
      %p279 = pneg %p278
      // Predicated region
      $region37: #{tranmodel_forward.3} parent=5 // pred_check
        _
      $region38: #{tranmodel_forward.3} parent=5 // pred_check_branch
        %281 = sbr.rel (%p278) target = $region40
      $region39: #{tranmodel_forward.3} parent=5 // pred_region
        %s282 = ssub.s32 %s14, 1
        %s283 = smul.u32 2, %s24
        %s284 = smul.u32 2, %s25
        %p285 = scmp.lt.s32.totalorder %s283, 3
        %s286 = scalar_select %p285, %s283, 3
        %p287 = scmp.lt.s32.totalorder %s284, 1
        %s288 = scalar_select %p287, %s284, 1
        %s289 = smul.addr %s286, 2
        %s290 = sadd.s32 %s288, %s289
        %s291 = smul.addr %s290, 4
        %s292 = scalar_lea.vmem %s0, %s291
        %p293 = pneg %p61
        %p294 = pneg %p58
        %s295 = smul.u32 2, %s24
        %s296 = smul.u32 2, %s26
        %p297 = scmp.lt.s32.totalorder %s295, 3
        %s298 = scalar_select %p297, %s295, 3
        %p299 = scmp.lt.s32.totalorder %s296, 1
        %s300 = scalar_select %p299, %s296, 1
        %s301 = smul.addr %s298, 2
        %s302 = sadd.s32 %s300, %s301
        %s303 = smul.addr %s302, 4
        %s304 = scalar_lea.vmem %s1, %s303
        %p305 = pneg %p89
        %p306 = pneg %p86
        %s307 = smul.u32 2, %s24
        %s308 = smul.u32 2, %s26
        %p309 = scmp.lt.s32.totalorder %s307, 3
        %s310 = scalar_select %p309, %s307, 3
        %p311 = scmp.lt.s32.totalorder %s308, 1
        %s312 = scalar_select %p311, %s308, 1
        %s313 = smul.addr %s310, 2
        %s314 = sadd.s32 %s312, %s313
        %s315 = smul.addr %s314, 4
        %s316 = scalar_lea.vmem %s2, %s315
        %p317 = pneg %p117
        %p318 = pneg %p114
        %s319 = smul.u32 2, %s24
        %s320 = smul.u32 2, %s25
        %p321 = scmp.lt.s32.totalorder %s319, 3
        %s322 = scalar_select %p321, %s319, 3
        %p323 = scmp.lt.s32.totalorder %s320, 1
        %s324 = scalar_select %p323, %s320, 1
        %s325 = smul.addr %s322, 2
        %s326 = sadd.s32 %s324, %s325
        %s327 = smul.addr %s326, 4
        %s328 = scalar_lea.vmem %s3, %s327
        %p329 = pneg %p145
        %p330 = pneg %p142
        %p331 = pneg %p166
        %p332 = pneg %p163
        %p333 = pneg %p194
        %p334 = pneg %p191
        %s335 = sand.u32 %s181, 1
        %s336 = scalar_lea.sflag [#allocation6], %s335
        %s337 = sand.u32 %s181, 1
        %s338 = smul.addr %s337, 16
        %s339 = scalar_lea.vmem [#allocation5], %s338
        %s340 = smul.u32 2, %s24
        %s341 = smul.u32 2, %s25
        %p342 = scmp.lt.s32.totalorder %s340, 3
        %s343 = scalar_select %p342, %s340, 3
        %p344 = scmp.lt.s32.totalorder %s341, 1
        %s345 = scalar_select %p344, %s341, 1
        %s346 = smul.addr %s343, 2
        %s347 = sadd.s32 %s345, %s346
        %s348 = smul.addr %s347, 4
        %s349 = scalar_lea.vmem %s0, %s348
        %s350 = smul.u32 2, %s24
        %s351 = smul.u32 2, %s25
        %s352 = smul.u32 2, %s24
        %s353 = smul.u32 2, %s26
        %p354 = scmp.lt.s32.totalorder %s352, 3
        %s355 = scalar_select %p354, %s352, 3
        %p356 = scmp.lt.s32.totalorder %s353, 1
        %s357 = scalar_select %p356, %s353, 1
        %s358 = smul.addr %s355, 2
        %s359 = sadd.s32 %s357, %s358
        %s360 = smul.addr %s359, 4
        %s361 = scalar_lea.vmem %s1, %s360
        %s362 = smul.u32 2, %s24
        %s363 = smul.u32 2, %s26
        %s364 = smul.u32 2, %s24
        %s365 = smul.u32 2, %s26
        %p366 = scmp.lt.s32.totalorder %s364, 3
        %s367 = scalar_select %p366, %s364, 3
        %p368 = scmp.lt.s32.totalorder %s365, 1
        %s369 = scalar_select %p368, %s365, 1
        %s370 = smul.addr %s367, 2
        %s371 = sadd.s32 %s369, %s370
        %s372 = smul.addr %s371, 4
        %s373 = scalar_lea.vmem %s2, %s372
        %s374 = smul.u32 2, %s24
        %s375 = smul.u32 2, %s26
        %s376 = smul.u32 2, %s24
        %s377 = smul.u32 2, %s25
        %p378 = scmp.lt.s32.totalorder %s376, 3
        %s379 = scalar_select %p378, %s376, 3
        %p380 = scmp.lt.s32.totalorder %s377, 1
        %s381 = scalar_select %p380, %s377, 1
        %s382 = smul.addr %s379, 2
        %s383 = sadd.s32 %s381, %s382
        %s384 = smul.addr %s383, 4
        %s385 = scalar_lea.vmem %s3, %s384
        %s386 = smul.u32 2, %s24
        %s387 = smul.u32 2, %s25
        %s388 = smul.u32 2, %s24
        %s389 = smul.u32 2, %s25
        %p391 = scmp.eq.s32.totalorder %s26, 0
        // Predicated region
        $region41: #{tranmodel_forward.3} parent=39 // pred_check
          %p392 = pneg %p391
        $region42: #{tranmodel_forward.3} parent=39 // pred_check_branch
          %394 = sbr.rel (%p392) target = $region44
        $region43: #{tranmodel_forward.3} parent=39 // pred_region
          %vm395 = vcmask 7168
          %396 = vst.msk [vmem:[#allocation2] sm:$0xff] %vm395, -inf
          %397 = vst.msk [vmem:[#allocation2 + $0x8] sm:$0xff] %vm395, -inf
          %398 = vst.msk [vmem:[#allocation2 + $0x10] sm:$0xff] %vm395, -inf
          %399 = vst.msk [vmem:[#allocation2 + $0x18] sm:$0xff] %vm395, -inf
          %400 = vst.msk [vmem:[#allocation3] sm:$0xff] %vm395, 0.0
          %401 = vst.msk [vmem:[#allocation3 + $0x8] sm:$0xff] %vm395, 0.0
          %402 = vst.msk [vmem:[#allocation3 + $0x10] sm:$0xff] %vm395, 0.0
          %403 = vst.msk [vmem:[#allocation3 + $0x18] sm:$0xff] %vm395, 0.0
          %404 = vst [vmem:[#allocation4] sm:$0xff] 0.0
          %405 = vst [vmem:[#allocation4 + $0x8] sm:$0xff] 0.0
          %406 = vst [vmem:[#allocation4 + $0x10] sm:$0xff] 0.0
          %407 = vst [vmem:[#allocation4 + $0x18] sm:$0xff] 0.0
        $region44: #{tranmodel_forward.3} parent=39 // pred_fallthru
          _
        %v408 = vld [vmem:[%s349] sm:$0xf]
        %v409 = vld [vmem:[%s349 + $0x4] sm:$0xf]
        %v410 = vld [vmem:[%s349 + $0x8] sm:$0xf]
        %v411 = vld [vmem:[%s349 + $0xc] sm:$0xf]
        %v412 = vld [vmem:[%s361] sm:$0xf]
        %v413 = vld [vmem:[%s361 + $0x4] sm:$0xf]
        %v414 = vld [vmem:[%s361 + $0x8] sm:$0xf]
        %v415 = vld [vmem:[%s361 + $0xc] sm:$0xf]
        %v418 = vunpack.c.l.b16 %v408
        %v419 = vunpack.c.l.b16 %v409
        %v420 = vpack.c.b16 %v419, %v418
        %v424 = vunpack.c.l.b16 %v412
        %v425 = vunpack.c.l.b16 %v413
        %v426 = vpack.c.b16 %v425, %v424
        %428 = vmatprep.subr.bf16.mxu0 0
        %429 = vmatpush1.bf16.xpose.msra.mxu0 0
        %430 = vmatprep.subr.bf16.mxu0 0
        %431 = vmatpush1.bf16.xpose.msra.mxu0 0
        %432 = vmatprep.subr.bf16.mxu0 0
        %433 = vmatpush1.bf16.xpose.msra.mxu0 0
        %434 = vmatprep.subr.bf16.mxu0 0
        %435 = vmatpush1.bf16.xpose.msra.mxu0 0
        %436 = vmatprep.subr.bf16.mxu0 0
        %437 = vmatpush1.bf16.xpose.msra.mxu0 0
        %438 = vmatprep.subr.bf16.mxu0 0
        %439 = vmatpush1.bf16.xpose.msra.mxu0 0
        %440 = vmatprep.subr.bf16.mxu0 0
        %441 = vmatpush1.bf16.xpose.msra.mxu0 0
        %442 = vmatprep.subr.bf16.mxu0 0
        %443 = vmatpush1.bf16.xpose.msra.mxu0 %v426
        %444 = vmatprep.subr.bf16.mxu0 0
        %445 = vmatpush2.bf16.xpose.msra.mxu0 0
        %446 = vmatprep.subr.bf16.mxu0 0
        %447 = vmatpush2.bf16.xpose.msra.mxu0 0
        %448 = vmatprep.subr.bf16.mxu0 0
        %449 = vmatpush2.bf16.xpose.msra.mxu0 0
        %450 = vmatprep.subr.bf16.mxu0 0
        %451 = vmatpush2.bf16.xpose.msra.mxu0 0
        %452 = vmatprep.subr.bf16.mxu0 0
        %453 = vmatpush2.bf16.xpose.msra.mxu0 0
        %454 = vmatprep.subr.bf16.mxu0 0
        %455 = vmatpush2.bf16.xpose.msra.mxu0 0
        %456 = vmatprep.subr.bf16.mxu0 0
        %457 = vmatpush2.bf16.xpose.msra.mxu0 0
        %458 = vmatprep.subr.bf16.mxu0 0
        %459 = vmatpush2.bf16.xpose.msra.mxu0 0
        %460 = vmatprep.mubr.bf16.mxu0 0
        %461 = vmatmul.mubr.bf16.gmra.mxu0 %v420
        %v462 = vpop.f32.mrf.mxu0
        %v463 = vadd.f32 0.0, %v462
        %v464 = vpop.f32.mrf.mxu0
        %v465 = vpop.f32.mrf.mxu0
        %v466 = vadd.f32 0.0, %v465
        %v467 = vpop.f32.mrf.mxu0
        %468 = vdwg.mxu0
        %v471 = vunpack.c.l.b16 %v410
        %v472 = vunpack.c.l.b16 %v411
        %v473 = vpack.c.b16 %v472, %v471
        %v477 = vunpack.c.l.b16 %v414
        %v478 = vunpack.c.l.b16 %v415
        %v479 = vpack.c.b16 %v478, %v477
        %481 = vmatprep.subr.bf16.mxu0 0
        %482 = vmatpush1.bf16.xpose.msra.mxu0 0
        %483 = vmatprep.subr.bf16.mxu0 0
        %484 = vmatpush1.bf16.xpose.msra.mxu0 0
        %485 = vmatprep.subr.bf16.mxu0 0
        %486 = vmatpush1.bf16.xpose.msra.mxu0 0
        %487 = vmatprep.subr.bf16.mxu0 0
        %488 = vmatpush1.bf16.xpose.msra.mxu0 0
        %489 = vmatprep.subr.bf16.mxu0 0
        %490 = vmatpush1.bf16.xpose.msra.mxu0 0
        %491 = vmatprep.subr.bf16.mxu0 0
        %492 = vmatpush1.bf16.xpose.msra.mxu0 0
        %493 = vmatprep.subr.bf16.mxu0 0
        %494 = vmatpush1.bf16.xpose.msra.mxu0 0
        %495 = vmatprep.subr.bf16.mxu0 0
        %496 = vmatpush1.bf16.xpose.msra.mxu0 %v479
        %497 = vmatprep.subr.bf16.mxu0 0
        %498 = vmatpush2.bf16.xpose.msra.mxu0 0
        %499 = vmatprep.subr.bf16.mxu0 0
        %500 = vmatpush2.bf16.xpose.msra.mxu0 0
        %501 = vmatprep.subr.bf16.mxu0 0
        %502 = vmatpush2.bf16.xpose.msra.mxu0 0
        %503 = vmatprep.subr.bf16.mxu0 0
        %504 = vmatpush2.bf16.xpose.msra.mxu0 0
        %505 = vmatprep.subr.bf16.mxu0 0
        %506 = vmatpush2.bf16.xpose.msra.mxu0 0
        %507 = vmatprep.subr.bf16.mxu0 0
        %508 = vmatpush2.bf16.xpose.msra.mxu0 0
        %509 = vmatprep.subr.bf16.mxu0 0
        %510 = vmatpush2.bf16.xpose.msra.mxu0 0
        %511 = vmatprep.subr.bf16.mxu0 0
        %512 = vmatpush2.bf16.xpose.msra.mxu0 0
        %513 = vmatprep.mubr.bf16.mxu0 0
        %514 = vmatmul.mubr.bf16.gmra.mxu0 %v473
        %v515 = vpop.f32.mrf.mxu0
        %v516 = vadd.f32 0.0, %v515
        %v517 = vpop.f32.mrf.mxu0
        %v518 = vpop.f32.mrf.mxu0
        %v519 = vadd.f32 0.0, %v518
        %v520 = vpop.f32.mrf.mxu0
        %521 = vdwg.mxu0
        %v522 = vld [vmem:[#allocation2] sm:$0xff]
        %v523 = vld [vmem:[#allocation2 + $0x8] sm:$0xff]
        %v524 = vld [vmem:[#allocation2 + $0x10] sm:$0xff]
        %v525 = vld [vmem:[#allocation2 + $0x18] sm:$0xff]
        %vm526 = vcmask 130048
        %v527 = vsel %vm526, %v463, -inf
        %528 = vmax.xlane.f32.xlu0 %v527
        %v529 = vpop.xlane.xlu0 %528
        %v530 = vsel %vm526, %v466, -inf
        %531 = vmax.xlane.f32.xlu0 %v530
        %v532 = vpop.xlane.xlu0 %531
        %v533 = vsel %vm526, %v516, -inf
        %534 = vmax.xlane.f32.xlu0 %v533
        %v535 = vpop.xlane.xlu0 %534
        %v536 = vsel %vm526, %v519, -inf
        %537 = vmax.xlane.f32.xlu0 %v536
        %v538 = vpop.xlane.xlu0 %537
        %v539 = vmax.f32 %v522, %v529
        %v540 = vmax.f32 %v523, %v532
        %v541 = vmax.f32 %v524, %v535
        %v542 = vmax.f32 %v525, %v538
        %v543 = vsub.f32 %v522, %v539
        %v544 = vsub.f32 %v523, %v540
        %v545 = vsub.f32 %v524, %v541
        %v546 = vsub.f32 %v525, %v542
        %v547 = vmul.f32 %v543, 1.442695
        %v548 = vpow.pop %v547
        %v549 = vmul.f32 %v544, 1.442695
        %v550 = vpow.pop %v549
        %v551 = vmul.f32 %v545, 1.442695
        %v552 = vpow.pop %v551
        %v553 = vmul.f32 %v546, 1.442695
        %v554 = vpow.pop %v553
        %556 = vset.pattern.permute.xlu0 0
        %557 = vperm.xlu0 %556, %v539
        %v558 = vpop.permute.xlu0 %557
        %561 = vset.pattern.permute.xlu0 0
        %562 = vperm.xlu0 %561, %v540
        %v563 = vpop.permute.xlu0 %562
        %566 = vset.pattern.permute.xlu0 0
        %567 = vperm.xlu0 %566, %v541
        %v568 = vpop.permute.xlu0 %567
        %571 = vset.pattern.permute.xlu0 0
        %572 = vperm.xlu0 %571, %v542
        %v573 = vpop.permute.xlu0 %572
        %v575 = vsub.f32 %v463, %v558
        %v576 = vsub.f32 %v466, %v563
        %v577 = vsub.f32 %v516, %v568
        %v578 = vsub.f32 %v519, %v573
        %v579 = vmul.f32 %v575, 1.442695
        %v580 = vpow.pop %v579
        %v581 = vmul.f32 %v576, 1.442695
        %v582 = vpow.pop %v581
        %v583 = vmul.f32 %v577, 1.442695
        %v584 = vpow.pop %v583
        %v585 = vmul.f32 %v578, 1.442695
        %v586 = vpow.pop %v585
        %v587 = vld [vmem:[#allocation3] sm:$0xff]
        %v588 = vld [vmem:[#allocation3 + $0x8] sm:$0xff]
        %v589 = vld [vmem:[#allocation3 + $0x10] sm:$0xff]
        %v590 = vld [vmem:[#allocation3 + $0x18] sm:$0xff]
        %v591 = vmul.f32 %v548, %v587
        %v592 = vmul.f32 %v550, %v588
        %v593 = vmul.f32 %v552, %v589
        %v594 = vmul.f32 %v554, %v590
        %v595 = vsel %vm526, %v580, 0.0
        %596 = vadd.xlane.f32.xlu0 %v595
        %v597 = vpop.xlane.xlu0 %596
        %v598 = vsel %vm526, %v582, 0.0
        %599 = vadd.xlane.f32.xlu0 %v598
        %v600 = vpop.xlane.xlu0 %599
        %v601 = vsel %vm526, %v584, 0.0
        %602 = vadd.xlane.f32.xlu0 %v601
        %v603 = vpop.xlane.xlu0 %602
        %v604 = vsel %vm526, %v586, 0.0
        %605 = vadd.xlane.f32.xlu0 %v604
        %v606 = vpop.xlane.xlu0 %605
        %v607 = vadd.f32 %v591, %v597
        %v608 = vadd.f32 %v592, %v600
        %v609 = vadd.f32 %v593, %v603
        %v610 = vadd.f32 %v594, %v606
        %vm611 = vcmask 7168
        %612 = vst.msk [vmem:[#allocation3] sm:$0xff] %vm611, %v607
        %613 = vst.msk [vmem:[#allocation3 + $0x8] sm:$0xff] %vm611, %v608
        %614 = vst.msk [vmem:[#allocation3 + $0x10] sm:$0xff] %vm611, %v609
        %615 = vst.msk [vmem:[#allocation3 + $0x18] sm:$0xff] %vm611, %v610
        %v616 = vld [vmem:[#allocation4] sm:$0xff]
        %v617 = vld [vmem:[#allocation4 + $0x8] sm:$0xff]
        %v618 = vld [vmem:[#allocation4 + $0x10] sm:$0xff]
        %v619 = vld [vmem:[#allocation4 + $0x18] sm:$0xff]
        %621 = vset.pattern.permute.xlu0 0
        %622 = vperm.xlu0 %621, %v548
        %v623 = vpop.permute.xlu0 %622
        %626 = vset.pattern.permute.xlu0 0
        %627 = vperm.xlu0 %626, %v550
        %v628 = vpop.permute.xlu0 %627
        %631 = vset.pattern.permute.xlu0 0
        %632 = vperm.xlu0 %631, %v552
        %v633 = vpop.permute.xlu0 %632
        %636 = vset.pattern.permute.xlu0 0
        %637 = vperm.xlu0 %636, %v554
        %v638 = vpop.permute.xlu0 %637
        %v640 = vmul.f32 %v623, %v616
        %v641 = vmul.f32 %v628, %v617
        %v642 = vmul.f32 %v633, %v618
        %v643 = vmul.f32 %v638, %v619
        %v644 = vpack.c.bf16 %v582, %v580
        %v645 = vpack.c.bf16 %v586, %v584
        %v646 = vld [vmem:[%s373] sm:$0xf]
        %v647 = vld [vmem:[%s373 + $0x4] sm:$0xf]
        %v648 = vld [vmem:[%s373 + $0x8] sm:$0xf]
        %v649 = vld [vmem:[%s373 + $0xc] sm:$0xf]
        %v652 = vunpack.c.l.b16 %v646
        %v653 = vunpack.c.l.b16 %v647
        %v654 = vpack.c.b16 %v653, %v652
        %v657 = vsel %vm526, %v644, 0
        %659 = vmatprep.subr.bf16.mxu0 0
        %660 = vmatpush1.bf16.msra.mxu0 0
        %661 = vmatprep.subr.bf16.mxu0 0
        %662 = vmatpush1.bf16.msra.mxu0 0
        %663 = vmatprep.subr.bf16.mxu0 0
        %664 = vmatpush1.bf16.msra.mxu0 0
        %665 = vmatprep.subr.bf16.mxu0 0
        %666 = vmatpush1.bf16.msra.mxu0 0
        %667 = vmatprep.subr.bf16.mxu0 0
        %668 = vmatpush1.bf16.msra.mxu0 0
        %669 = vmatprep.subr.bf16.mxu0 0
        %670 = vmatpush1.bf16.msra.mxu0 0
        %671 = vmatprep.subr.bf16.mxu0 0
        %672 = vmatpush1.bf16.msra.mxu0 0
        %673 = vmatprep.subr.bf16.mxu0 0
        %674 = vmatpush1.bf16.msra.mxu0 %v654
        %675 = vmatprep.subr.bf16.mxu0 0
        %676 = vmatpush2.bf16.msra.mxu0 0
        %677 = vmatprep.subr.bf16.mxu0 0
        %678 = vmatpush2.bf16.msra.mxu0 0
        %679 = vmatprep.subr.bf16.mxu0 0
        %680 = vmatpush2.bf16.msra.mxu0 0
        %681 = vmatprep.subr.bf16.mxu0 0
        %682 = vmatpush2.bf16.msra.mxu0 0
        %683 = vmatprep.subr.bf16.mxu0 0
        %684 = vmatpush2.bf16.msra.mxu0 0
        %685 = vmatprep.subr.bf16.mxu0 0
        %686 = vmatpush2.bf16.msra.mxu0 0
        %687 = vmatprep.subr.bf16.mxu0 0
        %688 = vmatpush2.bf16.msra.mxu0 0
        %689 = vmatprep.subr.bf16.mxu0 0
        %690 = vmatpush2.bf16.msra.mxu0 0
        %691 = vmatprep.mubr.bf16.mxu0 0
        %692 = vmatmul.mubr.bf16.gmra.mxu0 %v657
        %v693 = vpop.f32.mrf.mxu0
        %v694 = vadd.f32 0.0, %v693
        %v695 = vpop.f32.mrf.mxu0
        %v696 = vpop.f32.mrf.mxu0
        %v697 = vadd.f32 0.0, %v696
        %v698 = vpop.f32.mrf.mxu0
        %699 = vdwg.mxu0
        %v702 = vunpack.c.l.b16 %v648
        %v703 = vunpack.c.l.b16 %v649
        %v704 = vpack.c.b16 %v703, %v702
        %v707 = vsel %vm526, %v645, 0
        %709 = vmatprep.subr.bf16.mxu0 0
        %710 = vmatpush1.bf16.msra.mxu0 0
        %711 = vmatprep.subr.bf16.mxu0 0
        %712 = vmatpush1.bf16.msra.mxu0 0
        %713 = vmatprep.subr.bf16.mxu0 0
        %714 = vmatpush1.bf16.msra.mxu0 0
        %715 = vmatprep.subr.bf16.mxu0 0
        %716 = vmatpush1.bf16.msra.mxu0 0
        %717 = vmatprep.subr.bf16.mxu0 0
        %718 = vmatpush1.bf16.msra.mxu0 0
        %719 = vmatprep.subr.bf16.mxu0 0
        %720 = vmatpush1.bf16.msra.mxu0 0
        %721 = vmatprep.subr.bf16.mxu0 0
        %722 = vmatpush1.bf16.msra.mxu0 0
        %723 = vmatprep.subr.bf16.mxu0 0
        %724 = vmatpush1.bf16.msra.mxu0 %v704
        %725 = vmatprep.subr.bf16.mxu0 0
        %726 = vmatpush2.bf16.msra.mxu0 0
        %727 = vmatprep.subr.bf16.mxu0 0
        %728 = vmatpush2.bf16.msra.mxu0 0
        %729 = vmatprep.subr.bf16.mxu0 0
        %730 = vmatpush2.bf16.msra.mxu0 0
        %731 = vmatprep.subr.bf16.mxu0 0
        %732 = vmatpush2.bf16.msra.mxu0 0
        %733 = vmatprep.subr.bf16.mxu0 0
        %734 = vmatpush2.bf16.msra.mxu0 0
        %735 = vmatprep.subr.bf16.mxu0 0
        %736 = vmatpush2.bf16.msra.mxu0 0
        %737 = vmatprep.subr.bf16.mxu0 0
        %738 = vmatpush2.bf16.msra.mxu0 0
        %739 = vmatprep.subr.bf16.mxu0 0
        %740 = vmatpush2.bf16.msra.mxu0 0
        %741 = vmatprep.mubr.bf16.mxu0 0
        %742 = vmatmul.mubr.bf16.gmra.mxu0 %v707
        %v743 = vpop.f32.mrf.mxu0
        %v744 = vadd.f32 0.0, %v743
        %v745 = vpop.f32.mrf.mxu0
        %v746 = vpop.f32.mrf.mxu0
        %v747 = vadd.f32 0.0, %v746
        %v748 = vpop.f32.mrf.mxu0
        %749 = vdwg.mxu0
        %v750 = vadd.f32 %v640, %v694
        %v751 = vadd.f32 %v641, %v697
        %v752 = vadd.f32 %v642, %v744
        %v753 = vadd.f32 %v643, %v747
        %754 = vst [vmem:[#allocation4] sm:$0xff] %v750
        %755 = vst [vmem:[#allocation4 + $0x8] sm:$0xff] %v751
        %756 = vst [vmem:[#allocation4 + $0x10] sm:$0xff] %v752
        %757 = vst [vmem:[#allocation4 + $0x18] sm:$0xff] %v753
        %758 = vst.msk [vmem:[#allocation2] sm:$0xff] %vm611, %v539
        %759 = vst.msk [vmem:[#allocation2 + $0x8] sm:$0xff] %vm611, %v540
        %760 = vst.msk [vmem:[#allocation2 + $0x10] sm:$0xff] %vm611, %v541
        %761 = vst.msk [vmem:[#allocation2 + $0x18] sm:$0xff] %vm611, %v542
        // Predicated region
        $region45: #{tranmodel_forward.3} parent=39 // pred_check
          %p762 = pneg %p391
        $region46: #{tranmodel_forward.3} parent=39 // pred_check_branch
          %764 = sbr.rel (%p762) target = $region48
        $region47: #{tranmodel_forward.3} parent=39 // pred_region
          %v765 = vld [vmem:[#allocation4] sm:$0xff]
          %v766 = vld [vmem:[#allocation4 + $0x8] sm:$0xff]
          %v767 = vld [vmem:[#allocation4 + $0x10] sm:$0xff]
          %v768 = vld [vmem:[#allocation4 + $0x18] sm:$0xff]
          %v769 = vld [vmem:[#allocation3] sm:$0xff]
          %v770 = vld [vmem:[#allocation3 + $0x8] sm:$0xff]
          %v771 = vld [vmem:[#allocation3 + $0x10] sm:$0xff]
          %v772 = vld [vmem:[#allocation3 + $0x18] sm:$0xff]
          %v773 = vrcp.pop %v769
          %v774 = vrcp.pop %v770
          %v775 = vrcp.pop %v771
          %v776 = vrcp.pop %v772
          %778 = vset.pattern.permute.xlu0 0
          %779 = vperm.xlu0 %778, %v773
          %v780 = vpop.permute.xlu0 %779
          %783 = vset.pattern.permute.xlu0 0
          %784 = vperm.xlu0 %783, %v774
          %v785 = vpop.permute.xlu0 %784
          %788 = vset.pattern.permute.xlu0 0
          %789 = vperm.xlu0 %788, %v775
          %v790 = vpop.permute.xlu0 %789
          %793 = vset.pattern.permute.xlu0 0
          %794 = vperm.xlu0 %793, %v776
          %v795 = vpop.permute.xlu0 %794
          %v797 = vmul.f32 %v765, %v780
          %v798 = vmul.f32 %v766, %v785
          %v799 = vmul.f32 %v767, %v790
          %v800 = vmul.f32 %v768, %v795
          %v801 = vpack.c.bf16 %v798, %v797
          %v802 = vpack.c.bf16 %v800, %v799
          %v803 = vld [vmem:[%s4] sm:$0xf]
          %v804 = vld [vmem:[%s4 + $0x4] sm:$0xf]
          %v805 = vld [vmem:[%s4 + $0x8] sm:$0xf]
          %v806 = vld [vmem:[%s4 + $0xc] sm:$0xf]
          %v807 = vld [vmem:[%s4 + $0x10] sm:$0xf]
          %v808 = vld [vmem:[%s4 + $0x14] sm:$0xf]
          %v809 = vld [vmem:[%s4 + $0x18] sm:$0xf]
          %v810 = vld [vmem:[%s4 + $0x1c] sm:$0xf]
          %v811 = vld [vmem:[%s4 + $0x20] sm:$0xf]
          %v812 = vld [vmem:[%s4 + $0x24] sm:$0xf]
          %v813 = vld [vmem:[%s4 + $0x28] sm:$0xf]
          %v814 = vld [vmem:[%s4 + $0x2c] sm:$0xf]
          %v815 = vld [vmem:[%s4 + $0x30] sm:$0xf]
          %v816 = vld [vmem:[%s4 + $0x34] sm:$0xf]
          %v817 = vld [vmem:[%s4 + $0x38] sm:$0xf]
          %v818 = vld [vmem:[%s4 + $0x3c] sm:$0xf]
          %v819 = vld [vmem:[%s385] sm:$0xf]
          %v820 = vld [vmem:[%s385 + $0x4] sm:$0xf]
          %v821 = vld [vmem:[%s385 + $0x8] sm:$0xf]
          %v822 = vld [vmem:[%s385 + $0xc] sm:$0xf]
          %v823 = vunpack.c.l.bf16 %v819
          %v824 = vunpack.c.l.bf16 %v820
          %v825 = vunpack.c.l.bf16 %v821
          %v826 = vunpack.c.l.bf16 %v822
          %v843 = vunpack.c.l.b16 %v803
          %v844 = vunpack.c.l.b16 %v804
          %v845 = vunpack.c.l.b16 %v805
          %v846 = vunpack.c.l.b16 %v806
          %v847 = vunpack.c.l.b16 %v807
          %v848 = vunpack.c.l.b16 %v808
          %v849 = vunpack.c.l.b16 %v809
          %v850 = vunpack.c.l.b16 %v810
          %v851 = vunpack.c.l.b16 %v811
          %v852 = vunpack.c.l.b16 %v812
          %v853 = vunpack.c.l.b16 %v813
          %v854 = vunpack.c.l.b16 %v814
          %v855 = vunpack.c.l.b16 %v815
          %v856 = vunpack.c.l.b16 %v816
          %v857 = vunpack.c.l.b16 %v817
          %v858 = vunpack.c.l.b16 %v818
          %v859 = vpack.c.b16 %v844, %v843
          %v860 = vpack.c.b16 %v846, %v845
          %v861 = vpack.c.b16 %v848, %v847
          %v862 = vpack.c.b16 %v850, %v849
          %v863 = vpack.c.b16 %v852, %v851
          %v864 = vpack.c.b16 %v854, %v853
          %v865 = vpack.c.b16 %v856, %v855
          %v866 = vpack.c.b16 %v858, %v857
          %875 = vmatprep.subr.bf16.mxu0 0
          %876 = vmatpush1.bf16.msra.mxu0 %v866
          %877 = vmatprep.subr.bf16.mxu0 0
          %878 = vmatpush1.bf16.msra.mxu0 %v865
          %879 = vmatprep.subr.bf16.mxu0 0
          %880 = vmatpush1.bf16.msra.mxu0 %v864
          %881 = vmatprep.subr.bf16.mxu0 0
          %882 = vmatpush1.bf16.msra.mxu0 %v863
          %883 = vmatprep.subr.bf16.mxu0 0
          %884 = vmatpush1.bf16.msra.mxu0 %v862
          %885 = vmatprep.subr.bf16.mxu0 0
          %886 = vmatpush1.bf16.msra.mxu0 %v861
          %887 = vmatprep.subr.bf16.mxu0 0
          %888 = vmatpush1.bf16.msra.mxu0 %v860
          %889 = vmatprep.subr.bf16.mxu0 0
          %890 = vmatpush1.bf16.msra.mxu0 %v859
          %891 = vmatprep.subr.bf16.mxu0 0
          %892 = vmatpush2.bf16.msra.mxu0 0
          %893 = vmatprep.subr.bf16.mxu0 0
          %894 = vmatpush2.bf16.msra.mxu0 0
          %895 = vmatprep.subr.bf16.mxu0 0
          %896 = vmatpush2.bf16.msra.mxu0 0
          %897 = vmatprep.subr.bf16.mxu0 0
          %898 = vmatpush2.bf16.msra.mxu0 0
          %899 = vmatprep.subr.bf16.mxu0 0
          %900 = vmatpush2.bf16.msra.mxu0 0
          %901 = vmatprep.subr.bf16.mxu0 0
          %902 = vmatpush2.bf16.msra.mxu0 0
          %903 = vmatprep.subr.bf16.mxu0 0
          %904 = vmatpush2.bf16.msra.mxu0 0
          %905 = vmatprep.subr.bf16.mxu0 0
          %906 = vmatpush2.bf16.msra.mxu0 0
          %907 = vmatprep.mubr.bf16.mxu0 0
          %908 = vmatmul.mubr.bf16.gmra.mxu0 %v801
          %v909 = vpop.f32.mrf.mxu0
          %v910 = vadd.f32 %v823, %v909
          %v911 = vpop.f32.mrf.mxu0
          %v912 = vpop.f32.mrf.mxu0
          %v913 = vadd.f32 %v824, %v912
          %v914 = vpop.f32.mrf.mxu0
          %915 = vmatprep.mubr.bf16.mxu0 0
          %916 = vmatmul.mubr.bf16.gmra.mxu0 %v802
          %v917 = vpop.f32.mrf.mxu0
          %v918 = vadd.f32 %v825, %v917
          %v919 = vpop.f32.mrf.mxu0
          %v920 = vpop.f32.mrf.mxu0
          %v921 = vadd.f32 %v826, %v920
          %v922 = vpop.f32.mrf.mxu0
          %923 = vdwg.mxu0
          %v924 = vpack.c.bf16 %v913, %v910
          %v925 = vpack.c.bf16 %v921, %v918
          %v928 = vunpack.c.l.b16 %v924
          %v929 = vunpack.c.h.b16 %v924
          %v930 = vunpack.c.l.b16 %v925
          %v931 = vunpack.c.h.b16 %v925
          %v932 = vpack.c.b16 %v928, %v928
          %v933 = vpack.c.b16 %v929, %v929
          %v934 = vpack.c.b16 %v930, %v930
          %v935 = vpack.c.b16 %v931, %v931
          %940 = vst [vmem:[%s339] sm:$0xf] %v932
          %941 = vst [vmem:[%s339 + $0x4] sm:$0xf] %v933
          %942 = vst [vmem:[%s339 + $0x8] sm:$0xf] %v934
          %943 = vst [vmem:[%s339 + $0xc] sm:$0xf] %v935
        $region48: #{tranmodel_forward.3} parent=39 // pred_fallthru
          _
        %s944 = sand.u32 %s181, 1
        %s945 = scalar_lea.sflag [#allocation6], %s944
        %s946 = sand.u32 %s181, 1
        %s947 = smul.addr %s946, 16
        %s948 = scalar_lea.vmem [#allocation5], %s947
        // Predicated region
        $region49: #{tranmodel_forward.3} parent=39 // pred_check
          %p949 = pneg %p191
        $region50: #{tranmodel_forward.3} parent=39 // pred_check_branch
          %951 = sbr.rel (%p949) target = $region52
        $region51: #{tranmodel_forward.3} parent=39 // pred_region
          %s952 = smul.u32 2, %s24
          %s953 = smul.u32 2, %s25
          %s955 = ssub.s32 256, 256
          %956 = vsyncadd %s945, %s955
          %s957 = smul.addr %s952, 2
          %s958 = sadd.s32 %s953, %s957
          %s959 = smul.addr %s958, 64
          %s960 = scalar_lea.hbm %s5, %s959
          %s961 = sshll.u32 %s948, 4
          %s962 = int_to_ptr.vmem [resolvable:$true] %s961
          %967 = dma.vmem_to_hbm [thread:$0]  %s962, 256, %s960, %s945, 64, 64, 4
        $region52: #{tranmodel_forward.3} parent=39 // pred_fallthru
          _
      $region40: #{tranmodel_forward.3} parent=5 // pred_fallthru
        _
      %p968 = scmp.le.s32.totalorder 2, %s14
      // Predicated region
      $region53: #{tranmodel_forward.3} parent=5 // pred_check
        %p969 = pneg %p968
      $region54: #{tranmodel_forward.3} parent=5 // pred_check_branch
        %971 = sbr.rel (%p969) target = $region56
      $region55: #{tranmodel_forward.3} parent=5 // pred_region
        %s972 = ssub.s32 %s14, 2
        // Predicated region
        $region57: #{tranmodel_forward.3} parent=55 // pred_check
          %p973 = pneg %p197
        $region58: #{tranmodel_forward.3} parent=55 // pred_check_branch
          %975 = sbr.rel (%p973) target = $region60
        $region59: #{tranmodel_forward.3} parent=55 // pred_region
          %s976 = sand.u32 %s182, 1
          %s977 = scalar_lea.sflag [#allocation6], %s976
          %s978 = sand.u32 %s182, 1
          %s979 = smul.addr %s978, 16
          %s980 = scalar_lea.vmem [#allocation5], %s979
          %981 = dma.done %s977, 256
        $region60: #{tranmodel_forward.3} parent=55 // pred_fallthru
          _
      $region56: #{tranmodel_forward.3} parent=5 // pred_fallthru
        _
    $region6: #{tranmodel_forward.3} parent=1 // loop_footer
      %s18 = sadd.s32 1, %s14
    $region7: #{tranmodel_forward.3} parent=1 // loop_footer_branch
      %13 = sbr.rel target = $region3
    $region8: #{tranmodel_forward.3} parent=1 // loop_exit
      _
    %982 = vsyncpa [#allocation6], 1
    %s983 = scalar_lea.sflag [#allocation6], 1
    %984 = vsyncpa %s983, 1

// kernel: tranmodel_forward.2
$region0: #{tranmodel_forward.2}
  #allocation0 [shape = 'u32[]', space=smem, size = 0x4, offset = 0x4, fixed_abs, tag = 'smem constant byte address 0x4 - core index']
  #allocation1 [shape = 'u32[144,128]{1,0:T(1,128)}', space=vmem, size = 0x12000, scoped, tag = 'internal scratch']
  %s0 = inlined_call_operand.vmem [shape: bf16[64,4], index: 0, kind: input, shape index: {}]
  %s1 = inlined_call_operand.vmem [shape: bf16[4,8], index: 1, kind: input, shape index: {}]
  %s2 = inlined_call_operand.vmem [shape: f32[1,8], index: 2, kind: input, shape index: {}]
  %s3 = inlined_call_operand.vmem [shape: bf16[8,128], index: 3, kind: input, shape index: {}]
  %s4 = inlined_call_operand.vmem [shape: f32[1,128], index: 4, kind: input, shape index: {}]
  %s5 = inlined_call_operand.vmem [shape: bf16[128,384], index: 5, kind: input, shape index: {}]
  %s6 = inlined_call_operand.vmem [shape: bf16[64,128], index: 6, kind: output, shape index: {0}]
  %s7 = inlined_call_operand.vmem [shape: bf16[64,128], index: 7, kind: output, shape index: {1}]
  %s8 = inlined_call_operand.vmem [shape: bf16[64,128], index: 8, kind: output, shape index: {2}]
  %s9 = inlined_call_operand.vmem [shape: bf16[64,128], index: 9, kind: output, shape index: {3}]
  %10 = xla_tuple %s6, %s7, %s8, %s9
  %s11 = sld [smem:[#allocation0]]
  $region81: #{tranmodel_forward.2} parent=0
    _
  %s13 = ssub.s32 1, %s11
  %s14 = scalar_select 0, %s13, %s11
  loop: start=0, step=1, limit=4
  $region2: #{tranmodel_forward.2} parent=0 // loop_pre_header
    _
  $region3: #{tranmodel_forward.2} parent=0 // loop_header
    %s16 = sphi 0, %s20
    %p17 = scmp.ge.s32.totalorder %s16, 4
    %s26 = sphi 0, %s28
    %s29 = sphi 0, %s26
    %s30 = sphi 0, %s29
    %s46 = sphi 0, %s30
    %s50 = sphi 0, %s50
    %s52 = sphi 0, %s50
    %s53 = sphi 0, %s52
    %s67 = sphi 0, %s53
    %s71 = sphi 0, %s71
    %s73 = sphi 0, %s71
    %s74 = sphi 0, %s73
    %s88 = sphi 0, %s74
    %s92 = sphi 0, %s92
    %s94 = sphi 0, %s92
    %s95 = sphi 0, %s94
    %s109 = sphi 0, %s95
    %s113 = sphi 0, %s113
    %s115 = sphi 0, %s113
    %s116 = sphi 0, %s115
    %s130 = sphi 0, %s116
    %s134 = sphi 0, %s134
    %s136 = sphi 0, %s134
    %s137 = sphi 0, %s136
    %s151 = sphi 0, %s137
    %s157 = sphi 0, %s159
    %s160 = sphi 0, %s157
    %s161 = sphi 0, %s160
    %s177 = sphi 0, %s161
    %s183 = sphi 0, %s185
    %s186 = sphi 0, %s183
    %s187 = sphi 0, %s186
    %s203 = sphi 0, %s187
    %s209 = sphi 0, %s211
    %s212 = sphi 0, %s209
    %s213 = sphi 0, %s212
    %s229 = sphi 0, %s213
    %s235 = sphi 0, %s237
    %s238 = sphi 0, %s235
    %s239 = sphi 0, %s238
    %s255 = sphi 0, %s239
  $region4: #{tranmodel_forward.2} parent=0 // loop_header_branch
    %19 = sbr.rel (%p17) target = $region8
  $region5: #{tranmodel_forward.2} parent=0 // loop_body
    %s21 = ssub.s32 %s16, 1
    %s22 = ssub.s32 %s16, 2
    %s23 = sadd.s32 %s16, 1
    %s24 = ssub.s32 %s16, %s23
    %p25 = scmp.eq.s32.totalorder %s24, 0
    %s27 = sadd.s32 %s26, 1
    %s28 = scalar_select %p25, %s26, %s27
    %p31 = pneg %p25
    %p32 = scmp.eq.s32.totalorder %s16, 1
    %p33 = por %p31, %p32
    %p34 = scmp.ne.s32.totalorder %s26, %s29
    %p35 = scmp.eq.s32.totalorder %s16, 0
    %p36 = por %p34, %p35
    %p37 = scmp.ne.s32.totalorder %s26, %s29
    %p38 = scmp.eq.s32.totalorder %s21, 1
    %p39 = por %p37, %p38
    %p40 = scmp.ne.s32.totalorder %s29, %s30
    %p41 = scmp.eq.s32.totalorder %s21, 0
    %p42 = por %p40, %p41
    %p43 = scmp.ne.s32.totalorder %s29, %s30
    %p44 = scmp.eq.s32.totalorder %s22, 1
    %p45 = por %p43, %p44
    %p47 = scmp.ne.s32.totalorder %s30, %s46
    %p48 = scmp.eq.s32.totalorder %s22, 0
    %p49 = por %p47, %p48
    %s51 = sadd.s32 %s50, 1
    %p54 = scmp.eq.s32.totalorder %s16, 1
    %p55 = scmp.ne.s32.totalorder %s50, %s52
    %p56 = scmp.eq.s32.totalorder %s16, 0
    %p57 = por %p55, %p56
    %p58 = scmp.ne.s32.totalorder %s50, %s52
    %p59 = scmp.eq.s32.totalorder %s21, 1
    %p60 = por %p58, %p59
    %p61 = scmp.ne.s32.totalorder %s52, %s53
    %p62 = scmp.eq.s32.totalorder %s21, 0
    %p63 = por %p61, %p62
    %p64 = scmp.ne.s32.totalorder %s52, %s53
    %p65 = scmp.eq.s32.totalorder %s22, 1
    %p66 = por %p64, %p65
    %p68 = scmp.ne.s32.totalorder %s53, %s67
    %p69 = scmp.eq.s32.totalorder %s22, 0
    %p70 = por %p68, %p69
    %s72 = sadd.s32 %s71, 1
    %p75 = scmp.eq.s32.totalorder %s16, 1
    %p76 = scmp.ne.s32.totalorder %s71, %s73
    %p77 = scmp.eq.s32.totalorder %s16, 0
    %p78 = por %p76, %p77
    %p79 = scmp.ne.s32.totalorder %s71, %s73
    %p80 = scmp.eq.s32.totalorder %s21, 1
    %p81 = por %p79, %p80
    %p82 = scmp.ne.s32.totalorder %s73, %s74
    %p83 = scmp.eq.s32.totalorder %s21, 0
    %p84 = por %p82, %p83
    %p85 = scmp.ne.s32.totalorder %s73, %s74
    %p86 = scmp.eq.s32.totalorder %s22, 1
    %p87 = por %p85, %p86
    %p89 = scmp.ne.s32.totalorder %s74, %s88
    %p90 = scmp.eq.s32.totalorder %s22, 0
    %p91 = por %p89, %p90
    %s93 = sadd.s32 %s92, 1
    %p96 = scmp.eq.s32.totalorder %s16, 1
    %p97 = scmp.ne.s32.totalorder %s92, %s94
    %p98 = scmp.eq.s32.totalorder %s16, 0
    %p99 = por %p97, %p98
    %p100 = scmp.ne.s32.totalorder %s92, %s94
    %p101 = scmp.eq.s32.totalorder %s21, 1
    %p102 = por %p100, %p101
    %p103 = scmp.ne.s32.totalorder %s94, %s95
    %p104 = scmp.eq.s32.totalorder %s21, 0
    %p105 = por %p103, %p104
    %p106 = scmp.ne.s32.totalorder %s94, %s95
    %p107 = scmp.eq.s32.totalorder %s22, 1
    %p108 = por %p106, %p107
    %p110 = scmp.ne.s32.totalorder %s95, %s109
    %p111 = scmp.eq.s32.totalorder %s22, 0
    %p112 = por %p110, %p111
    %s114 = sadd.s32 %s113, 1
    %p117 = scmp.eq.s32.totalorder %s16, 1
    %p118 = scmp.ne.s32.totalorder %s113, %s115
    %p119 = scmp.eq.s32.totalorder %s16, 0
    %p120 = por %p118, %p119
    %p121 = scmp.ne.s32.totalorder %s113, %s115
    %p122 = scmp.eq.s32.totalorder %s21, 1
    %p123 = por %p121, %p122
    %p124 = scmp.ne.s32.totalorder %s115, %s116
    %p125 = scmp.eq.s32.totalorder %s21, 0
    %p126 = por %p124, %p125
    %p127 = scmp.ne.s32.totalorder %s115, %s116
    %p128 = scmp.eq.s32.totalorder %s22, 1
    %p129 = por %p127, %p128
    %p131 = scmp.ne.s32.totalorder %s116, %s130
    %p132 = scmp.eq.s32.totalorder %s22, 0
    %p133 = por %p131, %p132
    %s135 = sadd.s32 %s134, 1
    %p138 = scmp.eq.s32.totalorder %s16, 1
    %p139 = scmp.ne.s32.totalorder %s134, %s136
    %p140 = scmp.eq.s32.totalorder %s16, 0
    %p141 = por %p139, %p140
    %p142 = scmp.ne.s32.totalorder %s134, %s136
    %p143 = scmp.eq.s32.totalorder %s21, 1
    %p144 = por %p142, %p143
    %p145 = scmp.ne.s32.totalorder %s136, %s137
    %p146 = scmp.eq.s32.totalorder %s21, 0
    %p147 = por %p145, %p146
    %p148 = scmp.ne.s32.totalorder %s136, %s137
    %p149 = scmp.eq.s32.totalorder %s22, 1
    %p150 = por %p148, %p149
    %p152 = scmp.ne.s32.totalorder %s137, %s151
    %p153 = scmp.eq.s32.totalorder %s22, 0
    %p154 = por %p152, %p153
    %s155 = ssub.s32 %s16, %s23
    %p156 = scmp.eq.s32.totalorder %s155, 0
    %s158 = sadd.s32 %s157, 1
    %s159 = scalar_select %p156, %s157, %s158
    %p162 = pneg %p156
    %p163 = scmp.eq.s32.totalorder %s16, 1
    %p164 = por %p162, %p163
    %p165 = scmp.ne.s32.totalorder %s157, %s160
    %p166 = scmp.eq.s32.totalorder %s16, 0
    %p167 = por %p165, %p166
    %p168 = scmp.ne.s32.totalorder %s157, %s160
    %p169 = scmp.eq.s32.totalorder %s21, 1
    %p170 = por %p168, %p169
    %p171 = scmp.ne.s32.totalorder %s160, %s161
    %p172 = scmp.eq.s32.totalorder %s21, 0
    %p173 = por %p171, %p172
    %p174 = scmp.ne.s32.totalorder %s160, %s161
    %p175 = scmp.eq.s32.totalorder %s22, 1
    %p176 = por %p174, %p175
    %p178 = scmp.ne.s32.totalorder %s161, %s177
    %p179 = scmp.eq.s32.totalorder %s22, 0
    %p180 = por %p178, %p179
    %s181 = ssub.s32 %s16, %s23
    %p182 = scmp.eq.s32.totalorder %s181, 0
    %s184 = sadd.s32 %s183, 1
    %s185 = scalar_select %p182, %s183, %s184
    %p188 = pneg %p182
    %p189 = scmp.eq.s32.totalorder %s16, 1
    %p190 = por %p188, %p189
    %p191 = scmp.ne.s32.totalorder %s183, %s186
    %p192 = scmp.eq.s32.totalorder %s16, 0
    %p193 = por %p191, %p192
    %p194 = scmp.ne.s32.totalorder %s183, %s186
    %p195 = scmp.eq.s32.totalorder %s21, 1
    %p196 = por %p194, %p195
    %p197 = scmp.ne.s32.totalorder %s186, %s187
    %p198 = scmp.eq.s32.totalorder %s21, 0
    %p199 = por %p197, %p198
    %p200 = scmp.ne.s32.totalorder %s186, %s187
    %p201 = scmp.eq.s32.totalorder %s22, 1
    %p202 = por %p200, %p201
    %p204 = scmp.ne.s32.totalorder %s187, %s203
    %p205 = scmp.eq.s32.totalorder %s22, 0
    %p206 = por %p204, %p205
    %s207 = ssub.s32 %s16, %s23
    %p208 = scmp.eq.s32.totalorder %s207, 0
    %s210 = sadd.s32 %s209, 1
    %s211 = scalar_select %p208, %s209, %s210
    %p214 = pneg %p208
    %p215 = scmp.eq.s32.totalorder %s16, 1
    %p216 = por %p214, %p215
    %p217 = scmp.ne.s32.totalorder %s209, %s212
    %p218 = scmp.eq.s32.totalorder %s16, 0
    %p219 = por %p217, %p218
    %p220 = scmp.ne.s32.totalorder %s209, %s212
    %p221 = scmp.eq.s32.totalorder %s21, 1
    %p222 = por %p220, %p221
    %p223 = scmp.ne.s32.totalorder %s212, %s213
    %p224 = scmp.eq.s32.totalorder %s21, 0
    %p225 = por %p223, %p224
    %p226 = scmp.ne.s32.totalorder %s212, %s213
    %p227 = scmp.eq.s32.totalorder %s22, 1
    %p228 = por %p226, %p227
    %p230 = scmp.ne.s32.totalorder %s213, %s229
    %p231 = scmp.eq.s32.totalorder %s22, 0
    %p232 = por %p230, %p231
    %s233 = ssub.s32 %s16, %s23
    %p234 = scmp.eq.s32.totalorder %s233, 0
    %s236 = sadd.s32 %s235, 1
    %s237 = scalar_select %p234, %s235, %s236
    %p240 = pneg %p234
    %p241 = scmp.eq.s32.totalorder %s16, 1
    %p242 = por %p240, %p241
    %p243 = scmp.ne.s32.totalorder %s235, %s238
    %p244 = scmp.eq.s32.totalorder %s16, 0
    %p245 = por %p243, %p244
    %p246 = scmp.ne.s32.totalorder %s235, %s238
    %p247 = scmp.eq.s32.totalorder %s21, 1
    %p248 = por %p246, %p247
    %p249 = scmp.ne.s32.totalorder %s238, %s239
    %p250 = scmp.eq.s32.totalorder %s21, 0
    %p251 = por %p249, %p250
    %p252 = scmp.ne.s32.totalorder %s238, %s239
    %p253 = scmp.eq.s32.totalorder %s22, 1
    %p254 = por %p252, %p253
    %p256 = scmp.ne.s32.totalorder %s239, %s255
    %p257 = scmp.eq.s32.totalorder %s22, 0
    %p258 = por %p256, %p257
    %p259 = scmp.le.s32.totalorder 1, %s16
    %p260 = scmp.lt.s32.totalorder %s16, 3
    %p261 = pnand %p259, %p260
    %p262 = pneg %p261
    // Predicated region
    $region9: #{tranmodel_forward.2} parent=5 // pred_check
      _
    $region10: #{tranmodel_forward.2} parent=5 // pred_check_branch
      %264 = sbr.rel (%p261) target = $region12
    $region11: #{tranmodel_forward.2} parent=5 // pred_region
      %s265 = ssub.s32 %s16, 1
      // Predicated region
      $region13: #{tranmodel_forward.2} parent=11 // pred_check
        %p266 = pneg %p63
      $region14: #{tranmodel_forward.2} parent=11 // pred_check_branch
        %268 = sbr.rel (%p266) target = $region16
      $region15: #{tranmodel_forward.2} parent=11 // pred_region
        _
      $region16: #{tranmodel_forward.2} parent=11 // pred_fallthru
        _
      // Predicated region
      $region17: #{tranmodel_forward.2} parent=11 // pred_check
        %p269 = pneg %p84
      $region18: #{tranmodel_forward.2} parent=11 // pred_check_branch
        %271 = sbr.rel (%p269) target = $region20
      $region19: #{tranmodel_forward.2} parent=11 // pred_region
        _
      $region20: #{tranmodel_forward.2} parent=11 // pred_fallthru
        _
      // Predicated region
      $region21: #{tranmodel_forward.2} parent=11 // pred_check
        %p272 = pneg %p105
      $region22: #{tranmodel_forward.2} parent=11 // pred_check_branch
        %274 = sbr.rel (%p272) target = $region24
      $region23: #{tranmodel_forward.2} parent=11 // pred_region
        _
      $region24: #{tranmodel_forward.2} parent=11 // pred_fallthru
        _
      // Predicated region
      $region25: #{tranmodel_forward.2} parent=11 // pred_check
        %p275 = pneg %p126
      $region26: #{tranmodel_forward.2} parent=11 // pred_check_branch
        %277 = sbr.rel (%p275) target = $region28
      $region27: #{tranmodel_forward.2} parent=11 // pred_region
        _
      $region28: #{tranmodel_forward.2} parent=11 // pred_fallthru
        _
      // Predicated region
      $region29: #{tranmodel_forward.2} parent=11 // pred_check
        %p278 = pneg %p147
      $region30: #{tranmodel_forward.2} parent=11 // pred_check_branch
        %280 = sbr.rel (%p278) target = $region32
      $region31: #{tranmodel_forward.2} parent=11 // pred_region
        _
      $region32: #{tranmodel_forward.2} parent=11 // pred_fallthru
        _
    $region12: #{tranmodel_forward.2} parent=5 // pred_fallthru
      _
    %p281 = scmp.lt.s32.totalorder %s16, 2
    // Predicated region
    $region33: #{tranmodel_forward.2} parent=5 // pred_check
      %p282 = pneg %p281
    $region34: #{tranmodel_forward.2} parent=5 // pred_check_branch
      %284 = sbr.rel (%p282) target = $region36
    $region35: #{tranmodel_forward.2} parent=5 // pred_region
      // Predicated region
      $region37: #{tranmodel_forward.2} parent=35 // pred_check
        %p285 = pneg %p36
      $region38: #{tranmodel_forward.2} parent=35 // pred_check_branch
        %287 = sbr.rel (%p285) target = $region40
      $region39: #{tranmodel_forward.2} parent=35 // pred_region
        %s288 = smul.u32 4, %s16
        %p289 = scmp.lt.s32.totalorder %s288, 7
        %s290 = scalar_select %p289, %s288, 7
        %s291 = smul.addr %s290, 4
        %s292 = scalar_lea.vmem %s0, %s291
        %s293 = smul.u32 4, %s16
      $region40: #{tranmodel_forward.2} parent=35 // pred_fallthru
        _
    $region36: #{tranmodel_forward.2} parent=5 // pred_fallthru
      _
    %p294 = scmp.le.s32.totalorder 1, %s16
    %p295 = scmp.lt.s32.totalorder %s16, 3
    %p296 = pnand %p294, %p295
    %p297 = pneg %p296
    // Predicated region
    $region41: #{tranmodel_forward.2} parent=5 // pred_check
      _
    $region42: #{tranmodel_forward.2} parent=5 // pred_check_branch
      %299 = sbr.rel (%p296) target = $region44
    $region43: #{tranmodel_forward.2} parent=5 // pred_region
      %s300 = ssub.s32 %s16, 1
      %s301 = smul.u32 4, %s21
      %p302 = scmp.lt.s32.totalorder %s301, 7
      %s303 = scalar_select %p302, %s301, 7
      %s304 = smul.addr %s303, 4
      %s305 = scalar_lea.vmem %s0, %s304
      %p306 = pneg %p42
      %p307 = pneg %p39
      %p308 = pneg %p63
      %p309 = pneg %p60
      %p310 = pneg %p84
      %p311 = pneg %p81
      %p312 = pneg %p105
      %p313 = pneg %p102
      %p314 = pneg %p126
      %p315 = pneg %p123
      %p316 = pneg %p147
      %p317 = pneg %p144
      %p318 = pneg %p173
      %p319 = pneg %p170
      %s320 = smul.u32 4, %s21
      %p321 = scmp.lt.s32.totalorder %s320, 7
      %s322 = scalar_select %p321, %s320, 7
      %s323 = smul.addr %s322, 4
      %s324 = scalar_lea.vmem %s6, %s323
      %p325 = pneg %p199
      %p326 = pneg %p196
      %s327 = smul.u32 4, %s21
      %p328 = scmp.lt.s32.totalorder %s327, 7
      %s329 = scalar_select %p328, %s327, 7
      %s330 = smul.addr %s329, 4
      %s331 = scalar_lea.vmem %s7, %s330
      %p332 = pneg %p225
      %p333 = pneg %p222
      %s334 = smul.u32 4, %s21
      %p335 = scmp.lt.s32.totalorder %s334, 7
      %s336 = scalar_select %p335, %s334, 7
      %s337 = smul.addr %s336, 4
      %s338 = scalar_lea.vmem %s8, %s337
      %p339 = pneg %p251
      %p340 = pneg %p248
      %s341 = smul.u32 4, %s21
      %p342 = scmp.lt.s32.totalorder %s341, 7
      %s343 = scalar_select %p342, %s341, 7
      %s344 = smul.addr %s343, 4
      %s345 = scalar_lea.vmem %s9, %s344
      %s346 = smul.u32 4, %s21
      %p347 = scmp.lt.s32.totalorder %s346, 7
      %s348 = scalar_select %p347, %s346, 7
      %s349 = smul.addr %s348, 4
      %s350 = scalar_lea.vmem %s0, %s349
      %s351 = smul.u32 4, %s21
      %s352 = smul.u32 4, %s21
      %p353 = scmp.lt.s32.totalorder %s352, 7
      %s354 = scalar_select %p353, %s352, 7
      %s355 = smul.addr %s354, 4
      %s356 = scalar_lea.vmem %s6, %s355
      %s357 = smul.u32 4, %s21
      %s358 = smul.u32 4, %s21
      %p359 = scmp.lt.s32.totalorder %s358, 7
      %s360 = scalar_select %p359, %s358, 7
      %s361 = smul.addr %s360, 4
      %s362 = scalar_lea.vmem %s7, %s361
      %s363 = smul.u32 4, %s21
      %s364 = smul.u32 4, %s21
      %p365 = scmp.lt.s32.totalorder %s364, 7
      %s366 = scalar_select %p365, %s364, 7
      %s367 = smul.addr %s366, 4
      %s368 = scalar_lea.vmem %s8, %s367
      %s369 = smul.u32 4, %s21
      %s370 = smul.u32 4, %s21
      %p371 = scmp.lt.s32.totalorder %s370, 7
      %s372 = scalar_select %p371, %s370, 7
      %s373 = smul.addr %s372, 4
      %s374 = scalar_lea.vmem %s9, %s373
      %s375 = smul.u32 4, %s21
      %v377 = vld [vmem:[%s350] sm:$0xf]
      %v378 = vld [vmem:[%s350 + $0x4] sm:$0xf]
      %v379 = vld [vmem:[%s350 + $0x8] sm:$0xf]
      %v380 = vld [vmem:[%s350 + $0xc] sm:$0xf]
      %v381 = vld [vmem:[%s1] sm:$0x3]
      %v382 = vld [vmem:[%s2] sm:$0x1]
      %v384 = vlaneseq
      %v385 = vshrl.u32 %v384, 7
      %v386 = vsub.s32 0, %v385
      %v387 = vrot.slane %v382, %v386
      %v393 = vunpack.c.l.b16 %v377
      %v394 = vunpack.c.l.b16 %v378
      %v395 = vunpack.c.l.b16 %v379
      %v396 = vunpack.c.l.b16 %v380
      %v397 = vpack.c.b16 %v394, %v393
      %v398 = vpack.c.b16 %v396, %v395
      %vm399 = vcmask 31744
      %v401 = vsel %vm399, %v397, 0
      %v404 = vsel %vm399, %v398, 0
      %vm406 = vcmask 1041408
      %v408 = vsel %vm406, %v381, 0
      %410 = vmatprep.subr.bf16.mxu0 0
      %411 = vmatpush1.bf16.msra.mxu0 0
      %412 = vmatprep.subr.bf16.mxu0 0
      %413 = vmatpush1.bf16.msra.mxu0 0
      %414 = vmatprep.subr.bf16.mxu0 0
      %415 = vmatpush1.bf16.msra.mxu0 0
      %416 = vmatprep.subr.bf16.mxu0 0
      %417 = vmatpush1.bf16.msra.mxu0 0
      %418 = vmatprep.subr.bf16.mxu0 0
      %419 = vmatpush1.bf16.msra.mxu0 0
      %420 = vmatprep.subr.bf16.mxu0 0
      %421 = vmatpush1.bf16.msra.mxu0 0
      %422 = vmatprep.subr.bf16.mxu0 0
      %423 = vmatpush1.bf16.msra.mxu0 0
      %424 = vmatprep.subr.bf16.mxu0 0
      %425 = vmatpush1.bf16.msra.mxu0 %v408
      %426 = vmatprep.subr.bf16.mxu0 0
      %427 = vmatpush2.bf16.msra.mxu0 0
      %428 = vmatprep.subr.bf16.mxu0 0
      %429 = vmatpush2.bf16.msra.mxu0 0
      %430 = vmatprep.subr.bf16.mxu0 0
      %431 = vmatpush2.bf16.msra.mxu0 0
      %432 = vmatprep.subr.bf16.mxu0 0
      %433 = vmatpush2.bf16.msra.mxu0 0
      %434 = vmatprep.subr.bf16.mxu0 0
      %435 = vmatpush2.bf16.msra.mxu0 0
      %436 = vmatprep.subr.bf16.mxu0 0
      %437 = vmatpush2.bf16.msra.mxu0 0
      %438 = vmatprep.subr.bf16.mxu0 0
      %439 = vmatpush2.bf16.msra.mxu0 0
      %440 = vmatprep.subr.bf16.mxu0 0
      %441 = vmatpush2.bf16.msra.mxu0 0
      %442 = vmatprep.mubr.bf16.mxu0 0
      %443 = vmatmul.mubr.bf16.gmra.mxu0 %v401
      %v444 = vpop.f32.mrf.mxu0
      %v445 = vadd.f32 %v387, %v444
      %v446 = vpop.f32.mrf.mxu0
      %v447 = vpop.f32.mrf.mxu0
      %v448 = vadd.f32 %v387, %v447
      %v449 = vpop.f32.mrf.mxu0
      %450 = vmatprep.mubr.bf16.mxu0 0
      %451 = vmatmul.mubr.bf16.gmra.mxu0 %v404
      %v452 = vpop.f32.mrf.mxu0
      %v453 = vadd.f32 %v387, %v452
      %v454 = vpop.f32.mrf.mxu0
      %v455 = vpop.f32.mrf.mxu0
      %v456 = vadd.f32 %v387, %v455
      %v457 = vpop.f32.mrf.mxu0
      %458 = vdwg.mxu0
      %v459 = vmax.f32 %v445, 0.0
      %v460 = vmax.f32 %v448, 0.0
      %v461 = vmax.f32 %v453, 0.0
      %v462 = vmax.f32 %v456, 0.0
      %v463 = vpack.c.bf16 %v460, %v459
      %v464 = vpack.c.bf16 %v462, %v461
      %v465 = vld [vmem:[%s3] sm:$0xf]
      %v466 = vld [vmem:[%s4] sm:$0x1]
      %v468 = vlaneseq
      %v469 = vshrl.u32 %v468, 7
      %v470 = vsub.s32 0, %v469
      %v471 = vrot.slane %v466, %v470
      %vm473 = vcmask 64512
      %v475 = vsel %vm473, %v463, 0
      %v478 = vsel %vm473, %v464, 0
      %vm480 = vcmask 1043456
      %v482 = vsel %vm480, %v465, 0
      %484 = vmatprep.subr.bf16.mxu0 0
      %485 = vmatpush1.bf16.msra.mxu0 0
      %486 = vmatprep.subr.bf16.mxu0 0
      %487 = vmatpush1.bf16.msra.mxu0 0
      %488 = vmatprep.subr.bf16.mxu0 0
      %489 = vmatpush1.bf16.msra.mxu0 0
      %490 = vmatprep.subr.bf16.mxu0 0
      %491 = vmatpush1.bf16.msra.mxu0 0
      %492 = vmatprep.subr.bf16.mxu0 0
      %493 = vmatpush1.bf16.msra.mxu0 0
      %494 = vmatprep.subr.bf16.mxu0 0
      %495 = vmatpush1.bf16.msra.mxu0 0
      %496 = vmatprep.subr.bf16.mxu0 0
      %497 = vmatpush1.bf16.msra.mxu0 0
      %498 = vmatprep.subr.bf16.mxu0 0
      %499 = vmatpush1.bf16.msra.mxu0 %v482
      %500 = vmatprep.subr.bf16.mxu0 0
      %501 = vmatpush2.bf16.msra.mxu0 0
      %502 = vmatprep.subr.bf16.mxu0 0
      %503 = vmatpush2.bf16.msra.mxu0 0
      %504 = vmatprep.subr.bf16.mxu0 0
      %505 = vmatpush2.bf16.msra.mxu0 0
      %506 = vmatprep.subr.bf16.mxu0 0
      %507 = vmatpush2.bf16.msra.mxu0 0
      %508 = vmatprep.subr.bf16.mxu0 0
      %509 = vmatpush2.bf16.msra.mxu0 0
      %510 = vmatprep.subr.bf16.mxu0 0
      %511 = vmatpush2.bf16.msra.mxu0 0
      %512 = vmatprep.subr.bf16.mxu0 0
      %513 = vmatpush2.bf16.msra.mxu0 0
      %514 = vmatprep.subr.bf16.mxu0 0
      %515 = vmatpush2.bf16.msra.mxu0 0
      %516 = vmatprep.mubr.bf16.mxu0 0
      %517 = vmatmul.mubr.bf16.gmra.mxu0 %v475
      %v518 = vpop.f32.mrf.mxu0
      %v519 = vadd.f32 %v471, %v518
      %v520 = vpop.f32.mrf.mxu0
      %v521 = vpop.f32.mrf.mxu0
      %v522 = vadd.f32 %v471, %v521
      %v523 = vpop.f32.mrf.mxu0
      %524 = vmatprep.mubr.bf16.mxu0 0
      %525 = vmatmul.mubr.bf16.gmra.mxu0 %v478
      %v526 = vpop.f32.mrf.mxu0
      %v527 = vadd.f32 %v471, %v526
      %v528 = vpop.f32.mrf.mxu0
      %v529 = vpop.f32.mrf.mxu0
      %v530 = vadd.f32 %v471, %v529
      %v531 = vpop.f32.mrf.mxu0
      %532 = vdwg.mxu0
      %v533 = vpack.c.bf16 %v522, %v519
      %v534 = vpack.c.bf16 %v530, %v527
      %v537 = vunpack.c.l.b16 %v533
      %v538 = vunpack.c.h.b16 %v533
      %v539 = vunpack.c.l.b16 %v534
      %v540 = vunpack.c.h.b16 %v534
      %v541 = vpack.c.b16 %v537, %v537
      %v542 = vpack.c.b16 %v538, %v538
      %v543 = vpack.c.b16 %v539, %v539
      %v544 = vpack.c.b16 %v540, %v540
      %549 = vst [vmem:[%s356] sm:$0xf] %v541
      %550 = vst [vmem:[%s356 + $0x4] sm:$0xf] %v542
      %551 = vst [vmem:[%s356 + $0x8] sm:$0xf] %v543
      %552 = vst [vmem:[%s356 + $0xc] sm:$0xf] %v544
      %v553 = vld [vmem:[%s5] sm:$0xff]
      %v554 = vld [vmem:[%s5 + $0x8] sm:$0xf]
      %v555 = vld [vmem:[%s5 + $0xc] sm:$0xff]
      %v556 = vld [vmem:[%s5 + $0x14] sm:$0xf]
      %v557 = vld [vmem:[%s5 + $0x18] sm:$0xff]
      %v558 = vld [vmem:[%s5 + $0x20] sm:$0xf]
      %v559 = vld [vmem:[%s5 + $0x24] sm:$0xff]
      %v560 = vld [vmem:[%s5 + $0x2c] sm:$0xf]
      %v561 = vld [vmem:[%s5 + $0x30] sm:$0xff]
      %v562 = vld [vmem:[%s5 + $0x38] sm:$0xf]
      %v563 = vld [vmem:[%s5 + $0x3c] sm:$0xff]
      %v564 = vld [vmem:[%s5 + $0x44] sm:$0xf]
      %v565 = vld [vmem:[%s5 + $0x48] sm:$0xff]
      %v566 = vld [vmem:[%s5 + $0x50] sm:$0xf]
      %v567 = vld [vmem:[%s5 + $0x54] sm:$0xff]
      %v568 = vld [vmem:[%s5 + $0x5c] sm:$0xf]
      %v569 = vld [vmem:[%s5 + $0x60] sm:$0xff]
      %v570 = vld [vmem:[%s5 + $0x68] sm:$0xf]
      %v571 = vld [vmem:[%s5 + $0x6c] sm:$0xff]
      %v572 = vld [vmem:[%s5 + $0x74] sm:$0xf]
      %v573 = vld [vmem:[%s5 + $0x78] sm:$0xff]
      %v574 = vld [vmem:[%s5 + $0x80] sm:$0xf]
      %v575 = vld [vmem:[%s5 + $0x84] sm:$0xff]
      %v576 = vld [vmem:[%s5 + $0x8c] sm:$0xf]
      %v577 = vld [vmem:[%s5 + $0x90] sm:$0xff]
      %v578 = vld [vmem:[%s5 + $0x98] sm:$0xf]
      %v579 = vld [vmem:[%s5 + $0x9c] sm:$0xff]
      %v580 = vld [vmem:[%s5 + $0xa4] sm:$0xf]
      %v581 = vld [vmem:[%s5 + $0xa8] sm:$0xff]
      %v582 = vld [vmem:[%s5 + $0xb0] sm:$0xf]
      %v583 = vld [vmem:[%s5 + $0xb4] sm:$0xff]
      %v584 = vld [vmem:[%s5 + $0xbc] sm:$0xf]
      %v617 = vunpack.c.l.b16 %v553
      %v618 = vunpack.c.h.b16 %v553
      %v619 = vunpack.c.l.b16 %v554
      %v620 = vunpack.c.l.b16 %v555
      %v621 = vunpack.c.h.b16 %v555
      %v622 = vunpack.c.l.b16 %v556
      %v623 = vunpack.c.l.b16 %v557
      %v624 = vunpack.c.h.b16 %v557
      %v625 = vunpack.c.l.b16 %v558
      %v626 = vunpack.c.l.b16 %v559
      %v627 = vunpack.c.h.b16 %v559
      %v628 = vunpack.c.l.b16 %v560
      %v629 = vunpack.c.l.b16 %v561
      %v630 = vunpack.c.h.b16 %v561
      %v631 = vunpack.c.l.b16 %v562
      %v632 = vunpack.c.l.b16 %v563
      %v633 = vunpack.c.h.b16 %v563
      %v634 = vunpack.c.l.b16 %v564
      %v635 = vunpack.c.l.b16 %v565
      %v636 = vunpack.c.h.b16 %v565
      %v637 = vunpack.c.l.b16 %v566
      %v638 = vunpack.c.l.b16 %v567
      %v639 = vunpack.c.h.b16 %v567
      %v640 = vunpack.c.l.b16 %v568
      %v641 = vunpack.c.l.b16 %v569
      %v642 = vunpack.c.h.b16 %v569
      %v643 = vunpack.c.l.b16 %v570
      %v644 = vunpack.c.l.b16 %v571
      %v645 = vunpack.c.h.b16 %v571
      %v646 = vunpack.c.l.b16 %v572
      %v647 = vunpack.c.l.b16 %v573
      %v648 = vunpack.c.h.b16 %v573
      %v649 = vunpack.c.l.b16 %v574
      %v650 = vunpack.c.l.b16 %v575
      %v651 = vunpack.c.h.b16 %v575
      %v652 = vunpack.c.l.b16 %v576
      %v653 = vunpack.c.l.b16 %v577
      %v654 = vunpack.c.h.b16 %v577
      %v655 = vunpack.c.l.b16 %v578
      %v656 = vunpack.c.l.b16 %v579
      %v657 = vunpack.c.h.b16 %v579
      %v658 = vunpack.c.l.b16 %v580
      %v659 = vunpack.c.l.b16 %v581
      %v660 = vunpack.c.h.b16 %v581
      %v661 = vunpack.c.l.b16 %v582
      %v662 = vunpack.c.l.b16 %v583
      %v663 = vunpack.c.h.b16 %v583
      %v664 = vunpack.c.l.b16 %v584
      %v665 = vpack.c.b16 %v620, %v617
      %v666 = vpack.c.b16 %v621, %v618
      %v667 = vpack.c.b16 %v622, %v619
      %v668 = vpack.c.b16 %v626, %v623
      %v669 = vpack.c.b16 %v627, %v624
      %v670 = vpack.c.b16 %v628, %v625
      %v671 = vpack.c.b16 %v632, %v629
      %v672 = vpack.c.b16 %v633, %v630
      %v673 = vpack.c.b16 %v634, %v631
      %v674 = vpack.c.b16 %v638, %v635
      %v675 = vpack.c.b16 %v639, %v636
      %v676 = vpack.c.b16 %v640, %v637
      %v677 = vpack.c.b16 %v644, %v641
      %v678 = vpack.c.b16 %v645, %v642
      %v679 = vpack.c.b16 %v646, %v643
      %v680 = vpack.c.b16 %v650, %v647
      %v681 = vpack.c.b16 %v651, %v648
      %v682 = vpack.c.b16 %v652, %v649
      %v683 = vpack.c.b16 %v656, %v653
      %v684 = vpack.c.b16 %v657, %v654
      %v685 = vpack.c.b16 %v658, %v655
      %v686 = vpack.c.b16 %v662, %v659
      %v687 = vpack.c.b16 %v663, %v660
      %v688 = vpack.c.b16 %v664, %v661
      %713 = vmatprep.subr.bf16.mxu0 %v687
      %714 = vmatpush1.bf16.msra.mxu0 %v686
      %715 = vmatprep.subr.bf16.mxu0 %v684
      %716 = vmatpush1.bf16.msra.mxu0 %v683
      %717 = vmatprep.subr.bf16.mxu0 %v681
      %718 = vmatpush1.bf16.msra.mxu0 %v680
      %719 = vmatprep.subr.bf16.mxu0 %v678
      %720 = vmatpush1.bf16.msra.mxu0 %v677
      %721 = vmatprep.subr.bf16.mxu0 %v675
      %722 = vmatpush1.bf16.msra.mxu0 %v674
      %723 = vmatprep.subr.bf16.mxu0 %v672
      %724 = vmatpush1.bf16.msra.mxu0 %v671
      %725 = vmatprep.subr.bf16.mxu0 %v669
      %726 = vmatpush1.bf16.msra.mxu0 %v668
      %727 = vmatprep.subr.bf16.mxu0 %v666
      %728 = vmatpush1.bf16.msra.mxu0 %v665
      %729 = vmatprep.subr.bf16.mxu0 0
      %730 = vmatpush2.bf16.msra.mxu0 0
      %731 = vmatprep.subr.bf16.mxu0 0
      %732 = vmatpush2.bf16.msra.mxu0 0
      %733 = vmatprep.subr.bf16.mxu0 0
      %734 = vmatpush2.bf16.msra.mxu0 0
      %735 = vmatprep.subr.bf16.mxu0 0
      %736 = vmatpush2.bf16.msra.mxu0 0
      %737 = vmatprep.subr.bf16.mxu0 0
      %738 = vmatpush2.bf16.msra.mxu0 0
      %739 = vmatprep.subr.bf16.mxu0 0
      %740 = vmatpush2.bf16.msra.mxu0 0
      %741 = vmatprep.subr.bf16.mxu0 0
      %742 = vmatpush2.bf16.msra.mxu0 0
      %743 = vmatprep.subr.bf16.mxu0 0
      %744 = vmatpush2.bf16.msra.mxu0 0
      %745 = vmatprep.mubr.bf16.mxu0 0
      %746 = vmatmul.mubr.bf16.gmra.mxu0 %v533
      %v747 = vpop.f32.mrf.mxu0
      %v748 = vadd.f32 0.0, %v747
      %v749 = vpop.f32.mrf.mxu0
      %v750 = vadd.f32 0.0, %v749
      %v751 = vpop.f32.mrf.mxu0
      %v752 = vadd.f32 0.0, %v751
      %v753 = vpop.f32.mrf.mxu0
      %v754 = vadd.f32 0.0, %v753
      %755 = vmatprep.mubr.bf16.mxu0 0
      %756 = vmatmul.mubr.bf16.gmra.mxu0 %v534
      %v757 = vpop.f32.mrf.mxu0
      %v758 = vadd.f32 0.0, %v757
      %v759 = vpop.f32.mrf.mxu0
      %v760 = vadd.f32 0.0, %v759
      %v761 = vpop.f32.mrf.mxu0
      %v762 = vadd.f32 0.0, %v761
      %v763 = vpop.f32.mrf.mxu0
      %v764 = vadd.f32 0.0, %v763
      %765 = vdwg.mxu0
      %766 = vmatprep.subr.bf16.mxu0 0
      %767 = vmatpush1.bf16.msra.mxu0 %v688
      %768 = vmatprep.subr.bf16.mxu0 0
      %769 = vmatpush1.bf16.msra.mxu0 %v685
      %770 = vmatprep.subr.bf16.mxu0 0
      %771 = vmatpush1.bf16.msra.mxu0 %v682
      %772 = vmatprep.subr.bf16.mxu0 0
      %773 = vmatpush1.bf16.msra.mxu0 %v679
      %774 = vmatprep.subr.bf16.mxu0 0
      %775 = vmatpush1.bf16.msra.mxu0 %v676
      %776 = vmatprep.subr.bf16.mxu0 0
      %777 = vmatpush1.bf16.msra.mxu0 %v673
      %778 = vmatprep.subr.bf16.mxu0 0
      %779 = vmatpush1.bf16.msra.mxu0 %v670
      %780 = vmatprep.subr.bf16.mxu0 0
      %781 = vmatpush1.bf16.msra.mxu0 %v667
      %782 = vmatprep.subr.bf16.mxu0 0
      %783 = vmatpush2.bf16.msra.mxu0 0
      %784 = vmatprep.subr.bf16.mxu0 0
      %785 = vmatpush2.bf16.msra.mxu0 0
      %786 = vmatprep.subr.bf16.mxu0 0
      %787 = vmatpush2.bf16.msra.mxu0 0
      %788 = vmatprep.subr.bf16.mxu0 0
      %789 = vmatpush2.bf16.msra.mxu0 0
      %790 = vmatprep.subr.bf16.mxu0 0
      %791 = vmatpush2.bf16.msra.mxu0 0
      %792 = vmatprep.subr.bf16.mxu0 0
      %793 = vmatpush2.bf16.msra.mxu0 0
      %794 = vmatprep.subr.bf16.mxu0 0
      %795 = vmatpush2.bf16.msra.mxu0 0
      %796 = vmatprep.subr.bf16.mxu0 0
      %797 = vmatpush2.bf16.msra.mxu0 0
      %798 = vmatprep.mubr.bf16.mxu0 0
      %799 = vmatmul.mubr.bf16.gmra.mxu0 %v533
      %v800 = vpop.f32.mrf.mxu0
      %v801 = vadd.f32 0.0, %v800
      %v802 = vpop.f32.mrf.mxu0
      %v803 = vpop.f32.mrf.mxu0
      %v804 = vadd.f32 0.0, %v803
      %v805 = vpop.f32.mrf.mxu0
      %806 = vmatprep.mubr.bf16.mxu0 0
      %807 = vmatmul.mubr.bf16.gmra.mxu0 %v534
      %v808 = vpop.f32.mrf.mxu0
      %v809 = vadd.f32 0.0, %v808
      %v810 = vpop.f32.mrf.mxu0
      %v811 = vpop.f32.mrf.mxu0
      %v812 = vadd.f32 0.0, %v811
      %v813 = vpop.f32.mrf.mxu0
      %814 = vdwg.mxu0
      %v815 = vmul.f32 %v748, 0.088388346
      %v816 = vmul.f32 %v752, 0.088388346
      %v817 = vmul.f32 %v758, 0.088388346
      %v818 = vmul.f32 %v762, 0.088388346
      %v819 = vpack.c.bf16 %v816, %v815
      %v820 = vpack.c.bf16 %v818, %v817
      %v823 = vunpack.c.l.b16 %v819
      %v824 = vunpack.c.h.b16 %v819
      %v825 = vunpack.c.l.b16 %v820
      %v826 = vunpack.c.h.b16 %v820
      %v827 = vpack.c.b16 %v823, %v823
      %v828 = vpack.c.b16 %v824, %v824
      %v829 = vpack.c.b16 %v825, %v825
      %v830 = vpack.c.b16 %v826, %v826
      %835 = vst [vmem:[%s362] sm:$0xf] %v827
      %836 = vst [vmem:[%s362 + $0x4] sm:$0xf] %v828
      %837 = vst [vmem:[%s362 + $0x8] sm:$0xf] %v829
      %838 = vst [vmem:[%s362 + $0xc] sm:$0xf] %v830
      %v839 = vpack.c.bf16 %v754, %v750
      %v840 = vpack.c.bf16 %v764, %v760
      %v843 = vunpack.c.l.b16 %v839
      %v844 = vunpack.c.h.b16 %v839
      %v845 = vunpack.c.l.b16 %v840
      %v846 = vunpack.c.h.b16 %v840
      %v847 = vpack.c.b16 %v843, %v843
      %v848 = vpack.c.b16 %v844, %v844
      %v849 = vpack.c.b16 %v845, %v845
      %v850 = vpack.c.b16 %v846, %v846
      %855 = vst [vmem:[%s368] sm:$0xf] %v847
      %856 = vst [vmem:[%s368 + $0x4] sm:$0xf] %v848
      %857 = vst [vmem:[%s368 + $0x8] sm:$0xf] %v849
      %858 = vst [vmem:[%s368 + $0xc] sm:$0xf] %v850
      %v859 = vpack.c.bf16 %v804, %v801
      %v860 = vpack.c.bf16 %v812, %v809
      %v863 = vunpack.c.l.b16 %v859
      %v864 = vunpack.c.h.b16 %v859
      %v865 = vunpack.c.l.b16 %v860
      %v866 = vunpack.c.h.b16 %v860
      %v867 = vpack.c.b16 %v863, %v863
      %v868 = vpack.c.b16 %v864, %v864
      %v869 = vpack.c.b16 %v865, %v865
      %v870 = vpack.c.b16 %v866, %v866
      %875 = vst [vmem:[%s374] sm:$0xf] %v867
      %876 = vst [vmem:[%s374 + $0x4] sm:$0xf] %v868
      %877 = vst [vmem:[%s374 + $0x8] sm:$0xf] %v869
      %878 = vst [vmem:[%s374 + $0xc] sm:$0xf] %v870
      %s879 = smul.u32 4, %s21
      %p880 = scmp.lt.s32.totalorder %s879, 7
      %s881 = scalar_select %p880, %s879, 7
      %s882 = smul.addr %s881, 4
      %s883 = scalar_lea.vmem %s6, %s882
      %s884 = smul.u32 4, %s21
      %p885 = scmp.lt.s32.totalorder %s884, 7
      %s886 = scalar_select %p885, %s884, 7
      %s887 = smul.addr %s886, 4
      %s888 = scalar_lea.vmem %s7, %s887
      %s889 = smul.u32 4, %s21
      %p890 = scmp.lt.s32.totalorder %s889, 7
      %s891 = scalar_select %p890, %s889, 7
      %s892 = smul.addr %s891, 4
      %s893 = scalar_lea.vmem %s8, %s892
      %s894 = smul.u32 4, %s21
      %p895 = scmp.lt.s32.totalorder %s894, 7
      %s896 = scalar_select %p895, %s894, 7
      %s897 = smul.addr %s896, 4
      %s898 = scalar_lea.vmem %s9, %s897
      // Predicated region
      $region45: #{tranmodel_forward.2} parent=43 // pred_check
        %p899 = pneg %p170
      $region46: #{tranmodel_forward.2} parent=43 // pred_check_branch
        %901 = sbr.rel (%p899) target = $region48
      $region47: #{tranmodel_forward.2} parent=43 // pred_region
        %s902 = smul.u32 4, %s21
      $region48: #{tranmodel_forward.2} parent=43 // pred_fallthru
        _
      // Predicated region
      $region49: #{tranmodel_forward.2} parent=43 // pred_check
        %p903 = pneg %p196
      $region50: #{tranmodel_forward.2} parent=43 // pred_check_branch
        %905 = sbr.rel (%p903) target = $region52
      $region51: #{tranmodel_forward.2} parent=43 // pred_region
        %s906 = smul.u32 4, %s21
      $region52: #{tranmodel_forward.2} parent=43 // pred_fallthru
        _
      // Predicated region
      $region53: #{tranmodel_forward.2} parent=43 // pred_check
        %p907 = pneg %p222
      $region54: #{tranmodel_forward.2} parent=43 // pred_check_branch
        %909 = sbr.rel (%p907) target = $region56
      $region55: #{tranmodel_forward.2} parent=43 // pred_region
        %s910 = smul.u32 4, %s21
      $region56: #{tranmodel_forward.2} parent=43 // pred_fallthru
        _
      // Predicated region
      $region57: #{tranmodel_forward.2} parent=43 // pred_check
        %p911 = pneg %p248
      $region58: #{tranmodel_forward.2} parent=43 // pred_check_branch
        %913 = sbr.rel (%p911) target = $region60
      $region59: #{tranmodel_forward.2} parent=43 // pred_region
        %s914 = smul.u32 4, %s21
      $region60: #{tranmodel_forward.2} parent=43 // pred_fallthru
        _
    $region44: #{tranmodel_forward.2} parent=5 // pred_fallthru
      _
    %p915 = scmp.le.s32.totalorder 2, %s16
    // Predicated region
    $region61: #{tranmodel_forward.2} parent=5 // pred_check
      %p916 = pneg %p915
    $region62: #{tranmodel_forward.2} parent=5 // pred_check_branch
      %918 = sbr.rel (%p916) target = $region64
    $region63: #{tranmodel_forward.2} parent=5 // pred_region
      %s919 = ssub.s32 %s16, 2
      // Predicated region
      $region65: #{tranmodel_forward.2} parent=63 // pred_check
        %p920 = pneg %p176
      $region66: #{tranmodel_forward.2} parent=63 // pred_check_branch
        %922 = sbr.rel (%p920) target = $region68
      $region67: #{tranmodel_forward.2} parent=63 // pred_region
        %s923 = smul.u32 4, %s22
        %p924 = scmp.lt.s32.totalorder %s923, 7
        %s925 = scalar_select %p924, %s923, 7
        %s926 = smul.addr %s925, 4
        %s927 = scalar_lea.vmem %s6, %s926
      $region68: #{tranmodel_forward.2} parent=63 // pred_fallthru
        _
      // Predicated region
      $region69: #{tranmodel_forward.2} parent=63 // pred_check
        %p928 = pneg %p202
      $region70: #{tranmodel_forward.2} parent=63 // pred_check_branch
        %930 = sbr.rel (%p928) target = $region72
      $region71: #{tranmodel_forward.2} parent=63 // pred_region
        %s931 = smul.u32 4, %s22
        %p932 = scmp.lt.s32.totalorder %s931, 7
        %s933 = scalar_select %p932, %s931, 7
        %s934 = smul.addr %s933, 4
        %s935 = scalar_lea.vmem %s7, %s934
      $region72: #{tranmodel_forward.2} parent=63 // pred_fallthru
        _
      // Predicated region
      $region73: #{tranmodel_forward.2} parent=63 // pred_check
        %p936 = pneg %p228
      $region74: #{tranmodel_forward.2} parent=63 // pred_check_branch
        %938 = sbr.rel (%p936) target = $region76
      $region75: #{tranmodel_forward.2} parent=63 // pred_region
        %s939 = smul.u32 4, %s22
        %p940 = scmp.lt.s32.totalorder %s939, 7
        %s941 = scalar_select %p940, %s939, 7
        %s942 = smul.addr %s941, 4
        %s943 = scalar_lea.vmem %s8, %s942
      $region76: #{tranmodel_forward.2} parent=63 // pred_fallthru
        _
      // Predicated region
      $region77: #{tranmodel_forward.2} parent=63 // pred_check
        %p944 = pneg %p254
      $region78: #{tranmodel_forward.2} parent=63 // pred_check_branch
        %946 = sbr.rel (%p944) target = $region80
      $region79: #{tranmodel_forward.2} parent=63 // pred_region
        %s947 = smul.u32 4, %s22
        %p948 = scmp.lt.s32.totalorder %s947, 7
        %s949 = scalar_select %p948, %s947, 7
        %s950 = smul.addr %s949, 4
        %s951 = scalar_lea.vmem %s9, %s950
      $region80: #{tranmodel_forward.2} parent=63 // pred_fallthru
        _
    $region64: #{tranmodel_forward.2} parent=5 // pred_fallthru
      _
  $region6: #{tranmodel_forward.2} parent=0 // loop_footer
    %s20 = sadd.s32 1, %s16
  $region7: #{tranmodel_forward.2} parent=0 // loop_footer_branch
    %15 = sbr.rel target = $region3
  $region8: #{tranmodel_forward.2} parent=0 // loop_exit
    _

</llo_original>
